<compile_context>
chip_gen: v7x
topology: tpu7x:2x2x1
jax: 0.10.0
libtpu: 0.0.40
codegen_flags: <defaults>
</compile_context>

<pallas_src>
import functools
import math

import jax
import jax.numpy as jnp
from jax import lax
from jax.experimental import pallas as pl
from jax.experimental.pallas import tpu as pltpu


# -----------------------------------------------------------------------------
# Tunables
# -----------------------------------------------------------------------------
# Matmul operand dtype. None -> use the activation dtype (keeps the fp32 demo
# numerically tight vs. the PyTorch fp32 reference). On v6e/v7x set to
# jnp.bfloat16: MXU peak needs bf16 operands and it halves VMEM/HBM tile bytes.
# Accumulation is always fp32 via preferred_element_type.
MATMUL_OPERAND_DTYPE = None

# Tile targets (largest aligned divisor <= target is used, so small demo shapes
# degrade gracefully to full-dim blocks). 256-class attention tiles feed the
# 256x256 MXU on v6e/v7x; on v5e keep ATTN_* at 128 (4x 128x128 MXU, 16 MiB
# default scoped VMEM). On v7x (64 MiB VMEM) re-check the scoped limit before
# raising these further (pltpu.CompilerParams(vmem_limit_bytes=...)).
LINEAR_TM = 256
LINEAR_TN = 256
LINEAR_TK = 512
ATTN_TQ = 256   # query rows per flash step
ATTN_TKV = 256  # key/value rows per flash step


def _operand_dtype(activation_dtype):
    return activation_dtype if MATMUL_OPERAND_DTYPE is None else MATMUL_OPERAND_DTYPE


def _sublane_align(compute_dtype):
    # bf16/fp16 pack 16 rows per sublane tile; fp32 packs 8.
    return 16 if compute_dtype in (jnp.bfloat16, jnp.float16) else 8


def _pick_tile(dim, target, align):
    """Largest tile <= target that divides `dim` and is a multiple of `align`.

    Falls back to the full dim, which always satisfies Mosaic's (8,128) block
    tiling rule (block dim == array dim).
    """
    if dim <= target:
        return dim
    t = (target // align) * align
    while t >= align:
        if dim % t == 0:
            return t
        t -= align
    return dim


# -----------------------------------------------------------------------------
# Kernel 1: tiled linear  y = x @ W^T + b   (W pre-transposed at init)
# -----------------------------------------------------------------------------
def linear_kernel(x_ref, wt_ref, b_ref, o_ref, acc_ref, *, compute_dtype):
    k = pl.program_id(2)

    @pl.when(k == 0)
    def _init():
        acc_ref[...] = jnp.zeros_like(acc_ref)

    # Weights are already stored in compute_dtype (cast once at init), so the
    # astype below is a no-op for them; only x may need a cast.
    acc_ref[...] += jnp.dot(
        x_ref[...].astype(compute_dtype),
        wt_ref[...].astype(compute_dtype),
        preferred_element_type=jnp.float32,
    )

    @pl.when(k == pl.num_programs(2) - 1)
    def _finalize():
        o_ref[...] = (acc_ref[...] + b_ref[...].astype(jnp.float32)).astype(o_ref.dtype)


def pallas_linear(x, w_t, b):
    """y = x @ w_t + b for x:(B,S,K), w_t:(K,N) pre-transposed, b:(N,)."""
    B, S, K = x.shape
    N = w_t.shape[1]
    M = B * S
    x2 = x.reshape(M, K)          # free reshape (contiguous split)
    b2 = b.reshape(1, N)
    out_dtype = x.dtype
    cd = _operand_dtype(out_dtype)

    tm = _pick_tile(M, LINEAR_TM, _sublane_align(cd))
    tn = _pick_tile(N, LINEAR_TN, 128)
    tk = _pick_tile(K, LINEAR_TK, 128)
    grid = (M // tm, N // tn, K // tk)

    y = pl.pallas_call(
        functools.partial(linear_kernel, compute_dtype=cd),
        out_shape=jax.ShapeDtypeStruct((M, N), out_dtype),
        grid_spec=pltpu.PrefetchScalarGridSpec(
            num_scalar_prefetch=0,
            grid=grid,
            in_specs=[
                pl.BlockSpec((tm, tk), lambda i, j, k: (i, k)),
                pl.BlockSpec((tk, tn), lambda i, j, k: (k, j)),
                pl.BlockSpec((1, tn), lambda i, j, k: (0, j)),
            ],
            out_specs=pl.BlockSpec((tm, tn), lambda i, j, k: (i, j)),
            scratch_shapes=[pltpu.VMEM((tm, tn), jnp.float32)],
        ),
        compiler_params=pltpu.CompilerParams(
            dimension_semantics=("parallel", "parallel", "arbitrary")
        ),
    )(x2, w_t, b2)
    return y.reshape(B, S, N)


# -----------------------------------------------------------------------------
# Kernel 2: flash-style scaled-dot-product attention, one head at a time
# -----------------------------------------------------------------------------
def flash_attention_kernel(q_ref, k_ref, v_ref, o_ref, m_sc, l_sc, acc_sc,
                           *, num_heads, head_dim, compute_dtype):
    # q_ref: (1, tq, E)   k_ref/v_ref: (1, tkv, E)   o_ref: (1, tq, E)
    # m_sc/l_sc: (tq, H) fp32 running max / sum     acc_sc: (tq, E) fp32
    ki = pl.program_id(2)
    H, D = num_heads, head_dim

    @pl.when(ki == 0)
    def _init():
        m_sc[...] = jnp.full_like(m_sc, -jnp.inf)
        l_sc[...] = jnp.zeros_like(l_sc)
        acc_sc[...] = jnp.zeros_like(acc_sc)

    q = q_ref[0]   # (tq, E); 1/sqrt(D) already folded into W_q / b_q at init
    k = k_ref[0]   # (tkv, E)
    v = v_ref[0]   # (tkv, E)

    # One head per iteration: only a single (tq, tkv) fp32 score tile is ever
    # live; each head's PV lands directly in its lane slice of the (tq, E) acc.
    # NOTE: the reference clamps scores to +-1e9; with mask=None that clamp is
    # a numerical no-op once the running max is subtracted, so it is dropped.
    for h in range(H):
        hd = pl.ds(h * D, D)   # head's lane slice in the E-wide packed layout
        hs = pl.ds(h, 1)       # head's stats column

        q_h = q[:, h * D:(h + 1) * D].astype(compute_dtype)        # (tq, D)
        k_h = k[:, h * D:(h + 1) * D].astype(compute_dtype)        # (tkv, D)
        # QK^T via dot_general contracting the LAST dims (no explicit k.T).
        s = lax.dot_general(q_h, k_h, (((1,), (1,)), ((), ())),
                            preferred_element_type=jnp.float32)    # (tq, tkv)

        m_prev = m_sc[:, hs]                                        # (tq, 1)
        m_new = jnp.maximum(m_prev, jnp.max(s, axis=-1, keepdims=True))
        alpha = jnp.exp(m_prev - m_new)                             # EUP
        p = jnp.exp(s - m_new)                                      # (tq, tkv)
        l_sc[:, hs] = alpha * l_sc[:, hs] + jnp.sum(p, axis=-1, keepdims=True)
        m_sc[:, hs] = m_new

        v_h = v[:, h * D:(h + 1) * D].astype(compute_dtype)        # (tkv, D)
        pv = jnp.dot(p.astype(compute_dtype), v_h,
                     preferred_element_type=jnp.float32)            # (tq, D)
        acc_sc[:, hd] = alpha * acc_sc[:, hd] + pv

    @pl.when(ki == pl.num_programs(2) - 1)
    def _finalize():
        inv_l = pl.reciprocal(l_sc[...], approx=True)               # (tq, H), EUP
        for h in range(H):
            hd = pl.ds(h * D, D)
            acc_sc[:, hd] = acc_sc[:, hd] * inv_l[:, h:h + 1]
        # Single unmasked, lane-dense (tq, E) store straight into (B, S, E).
        o_ref[0] = acc_sc[...].astype(o_ref.dtype)


def _flash_attention(q_arr, k_arr, v_arr, streams, B, Sq, Skv, H, D, out_dtype):
    """q/k/v arrays shaped (B, S, n_streams*E); `streams` gives the last-axis
    *block* index (blocks of width E) for each of q/k/v. The packed (B, S, 3E)
    QKV activation is simply passed three times with streams (0, 1, 2)."""
    E = H * D
    cd = _operand_dtype(out_dtype)
    al = _sublane_align(cd)
    tq = _pick_tile(Sq, ATTN_TQ, al)
    tkv = _pick_tile(Skv, ATTN_TKV, al)
    grid = (B, Sq // tq, Skv // tkv)
    qs, ks, vs = streams

    kernel = functools.partial(
        flash_attention_kernel,
        num_heads=H, head_dim=D, compute_dtype=cd,
    )
    return pl.pallas_call(
        kernel,
        out_shape=jax.ShapeDtypeStruct((B, Sq, E), out_dtype),
        grid_spec=pltpu.PrefetchScalarGridSpec(
            num_scalar_prefetch=0,
            grid=grid,
            in_specs=[
                pl.BlockSpec((1, tq, E), lambda b, qi, ki, s=qs: (b, qi, s)),
                pl.BlockSpec((1, tkv, E), lambda b, qi, ki, s=ks: (b, ki, s)),
                pl.BlockSpec((1, tkv, E), lambda b, qi, ki, s=vs: (b, ki, s)),
            ],
            out_specs=pl.BlockSpec((1, tq, E), lambda b, qi, ki: (b, qi, 0)),
            scratch_shapes=[
                pltpu.VMEM((tq, H), jnp.float32),   # running max per head
                pltpu.VMEM((tq, H), jnp.float32),   # running sum per head
                pltpu.VMEM((tq, E), jnp.float32),   # lane-dense output accumulator
            ],
        ),
        compiler_params=pltpu.CompilerParams(
            dimension_semantics=("parallel", "parallel", "arbitrary")
        ),
    )(q_arr, k_arr, v_arr)


# -----------------------------------------------------------------------------
# MultiHeadAttention forward (mirrors the PyTorch module, mask=None path)
# -----------------------------------------------------------------------------
def multi_head_attention(params, Q, K=None, V=None, *, num_heads):
    if K is None:
        K = Q
    if V is None:
        V = Q
    B, Sq, E = Q.shape
    H = num_heads
    assert E % H == 0, "embed_dim must be divisible by num_heads"
    D = E // H

    w_qkv_t, b_qkv = params["w_qkv_t"], params["b_qkv"]

    if (K is Q) and (V is Q):
        # Self-attention fast path: ONE fused QKV GEMM (x read once from HBM);
        # the packed (B, S, 3E) activation feeds attention directly (stream
        # picked via the BlockSpec last-axis block index, no reshape/transpose).
        qkv = pallas_linear(Q, w_qkv_t, b_qkv)                       # (B, S, 3E)
        attn = _flash_attention(qkv, qkv, qkv, (0, 1, 2),
                                B, Sq, Sq, H, D, Q.dtype)            # (B, S, E)
    else:
        # Cross-attention path: separate projections from slices of the fused
        # weight (supports Skv != Sq). The Q slice already carries 1/sqrt(D).
        Skv = K.shape[1]
        q = pallas_linear(Q, w_qkv_t[:, :E], b_qkv[:E])
        k = pallas_linear(K, w_qkv_t[:, E:2 * E], b_qkv[E:2 * E])
        v = pallas_linear(V, w_qkv_t[:, 2 * E:], b_qkv[2 * E:])
        attn = _flash_attention(q, k, v, (0, 0, 0), B, Sq, Skv, H, D, Q.dtype)

    # attn is already (B, S, E): no (B,H,S,D) transpose round trips before out_proj.
    return pallas_linear(attn, params["w_out_t"], params["b_out"])


# -----------------------------------------------------------------------------
# Params
# -----------------------------------------------------------------------------
def init_params(key, embed_dim, num_heads):
    ks = jax.random.split(key, 8)
    bound = 1.0 / math.sqrt(embed_dim)
    head_dim = embed_dim // num_heads
    scale = 1.0 / math.sqrt(head_dim)

    def lin(kw, kb):
        w = jax.random.uniform(kw, (embed_dim, embed_dim), jnp.float32, -bound, bound)
        b = jax.random.uniform(kb, (embed_dim,), jnp.float32, -bound, bound)
        return w, b

    wq, bq = lin(ks[0], ks[1])
    wk, bk = lin(ks[2], ks[3])
    wv, bv = lin(ks[4], ks[5])
    wo, bo = lin(ks[6], ks[7])

    wd = jnp.float32 if MATMUL_OPERAND_DTYPE is None else MATMUL_OPERAND_DTYPE
    # Kernel weights: Q/K/V fused, pre-transposed, 1/sqrt(D) folded into the Q
    # slice, and cast to the compute dtype ONCE here (no per-call/per-tile work).
    kernel_params = dict(
        w_qkv_t=jnp.concatenate([wq.T * scale, wk.T, wv.T], axis=1).astype(wd),  # (E, 3E)
        b_qkv=jnp.concatenate([bq * scale, bk, bv]),                              # (3E,) fp32
        w_out_t=wo.T.astype(wd),                                                  # (E, E)
        b_out=bo,                                                                 # (E,) fp32
    )
    raw_params = dict(wq=wq, bq=bq, wk=wk, bk=bk, wv=wv, bv=bv, wo=wo, bo=bo)
    return kernel_params, raw_params


# -----------------------------------------------------------------------------
# Pure-JAX reference (mirrors the PyTorch forward, mask=None)
# -----------------------------------------------------------------------------
def reference_mha(raw, Q, num_heads):
    B, S, E = Q.shape
    H = num_heads
    D = E // H

    def lin(x, w, b):
        return x @ w.T + b

    q = lin(Q, raw["wq"], raw["bq"]).reshape(B, S, H, D).transpose(0, 2, 1, 3)
    k = lin(Q, raw["wk"], raw["bk"]).reshape(B, S, H, D).transpose(0, 2, 1, 3)
    v = lin(Q, raw["wv"], raw["bv"]).reshape(B, S, H, D).transpose(0, 2, 1, 3)

    scores = jnp.einsum("bhqd,bhkd->bhqk", q, k) / math.sqrt(D)
    scores = jnp.clip(scores, -1e9, 1e9)
    attn_w = jax.nn.softmax(scores, axis=-1)
    out = jnp.einsum("bhqk,bhkd->bhqd", attn_w, v)
    out = out.transpose(0, 2, 1, 3).reshape(B, S, E)
    return lin(out, raw["wo"], raw["bo"])


if __name__ == "__main__":
    key = jax.random.PRNGKey(0)
    k_param, k_x = jax.random.split(key)

    batch, seq_len, embed_dim, num_heads = 2, 8, 128, 4
    params, raw = init_params(k_param, embed_dim, num_heads)
    x = jax.random.normal(k_x, (batch, seq_len, embed_dim), jnp.float32)

    fwd = jax.jit(functools.partial(multi_head_attention, num_heads=num_heads))
    out = jax.block_until_ready(fwd(params, x))

    ref = reference_mha(raw, x, num_heads)
    assert out.shape == (batch, seq_len, embed_dim)
    max_err = float(jnp.max(jnp.abs(out - ref)))
    assert max_err < 2e-3, f"mismatch vs reference: max abs err {max_err}"

    print("KERNEL_OK")
</pallas_src>

<mosaic_0001>
module attributes {stable_mosaic.version = 11 : i64} {
  func.func @linear_kernel(%arg0: i32, %arg1: i32, %arg2: i32, %arg3: memref<16x128xf32, #tpu.memory_space<vmem>>, %arg4: memref<128x128xf32, #tpu.memory_space<vmem>>, %arg5: memref<1x128xf32, #tpu.memory_space<vmem>>, %arg6: memref<16x128xf32, #tpu.memory_space<vmem>>, %arg7: memref<16x128xf32, #tpu.memory_space<vmem>>) attributes {dimension_semantics = [#tpu.dimension_semantics<parallel>, #tpu.dimension_semantics<parallel>, #tpu.dimension_semantics<arbitrary>], iteration_bounds = array<i64: 1, 1, 1>, scalar_prefetch = 0 : i64, scratch_operands = 1 : i64, tpu.core_type = #tpu.core_type<tc>, window_params = [{transform_indices = @transform_0, window_bounds = array<i64: 16, 128>}, {transform_indices = @transform_1, window_bounds = array<i64: 128, 128>}, {transform_indices = @transform_2, window_bounds = array<i64: 1, 128>}, {transform_indices = @transform_3, window_bounds = array<i64: 16, 128>}]} {
    %c0_i32 = arith.constant 0 : i32
    %0 = arith.cmpi eq, %arg2, %c0_i32 : i32
    %1 = arith.extui %0 : i1 to i32
    %c0_i32_0 = arith.constant 0 : i32
    %2 = arith.cmpi ne, %1, %c0_i32_0 : i32
    scf.if %2 {
      %cst_10 = arith.constant 0.000000e+00 : f32
      %12 = vector.broadcast %cst_10 : f32 to vector<16x128xf32>
      %c0_11 = arith.constant 0 : index
      %c0_12 = arith.constant 0 : index
      %13 = vector.load %arg7[%c0_11, %c0_12] : memref<16x128xf32, #tpu.memory_space<vmem>>, vector<16x128xf32>
      tpu.vector_store %arg7[%c0_11, %c0_12], %12 {strides = array<i32>} : memref<16x128xf32, #tpu.memory_space<vmem>>, vector<16x128xf32>,
    } else {
    }
    %c0 = arith.constant 0 : index
    %c0_1 = arith.constant 0 : index
    %3 = vector.load %arg7[%c0, %c0_1] : memref<16x128xf32, #tpu.memory_space<vmem>>, vector<16x128xf32>
    %c0_2 = arith.constant 0 : index
    %c0_3 = arith.constant 0 : index
    %4 = vector.load %arg3[%c0_2, %c0_3] : memref<16x128xf32, #tpu.memory_space<vmem>>, vector<16x128xf32>
    %c0_4 = arith.constant 0 : index
    %c0_5 = arith.constant 0 : index
    %5 = vector.load %arg4[%c0_4, %c0_5] : memref<128x128xf32, #tpu.memory_space<vmem>>, vector<128x128xf32>
    %cst = arith.constant dense<0.000000e+00> : vector<16x128xf32>
    %6 = tpu.matmul %4, %5, %cst {dimension_numbers = #tpu.dot_dimension_numbers<[1], [0], [0], [1], [0, 0, 1, 1], [], []>} : vector<16x128xf32>, vector<128x128xf32>, vector<16x128xf32> -> vector<16x128xf32>
    %7 = arith.addf %3, %6 : vector<16x128xf32>
    %c0_6 = arith.constant 0 : index
    %c0_7 = arith.constant 0 : index
    %8 = vector.load %arg7[%c0_6, %c0_7] : memref<16x128xf32, #tpu.memory_space<vmem>>, vector<16x128xf32>
    tpu.vector_store %arg7[%c0_6, %c0_7], %7 {strides = array<i32>} : memref<16x128xf32, #tpu.memory_space<vmem>>, vector<16x128xf32>,
    %c0_i32_8 = arith.constant 0 : i32
    %9 = arith.cmpi eq, %arg2, %c0_i32_8 : i32
    %10 = arith.extui %9 : i1 to i32
    %c0_i32_9 = arith.constant 0 : i32
    %11 = arith.cmpi ne, %10, %c0_i32_9 : i32
    scf.if %11 {
      %c0_10 = arith.constant 0 : index
      %c0_11 = arith.constant 0 : index
      %12 = vector.load %arg7[%c0_10, %c0_11] : memref<16x128xf32, #tpu.memory_space<vmem>>, vector<16x128xf32>
      %c0_12 = arith.constant 0 : index
      %c0_13 = arith.constant 0 : index
      %13 = vector.load %arg5[%c0_12, %c0_13] : memref<1x128xf32, #tpu.memory_space<vmem>>, vector<1x128xf32>
      %14 = vector.broadcast %13 : vector<1x128xf32> to vector<16x128xf32>
      %15 = arith.addf %12, %14 : vector<16x128xf32>
      %c0_14 = arith.constant 0 : index
      %c0_15 = arith.constant 0 : index
      %16 = vector.load %arg6[%c0_14, %c0_15] : memref<16x128xf32, #tpu.memory_space<vmem>>, vector<16x128xf32>
      tpu.vector_store %arg6[%c0_14, %c0_15], %15 {strides = array<i32>} : memref<16x128xf32, #tpu.memory_space<vmem>>, vector<16x128xf32>,
    } else {
    }
    return
  }
  func.func @transform_0(%arg0: i32, %arg1: i32, %arg2: i32) -> (i32, i32) {
    %c0_i32 = arith.constant 0 : i32
    return %arg0, %arg2 : i32, i32
  }
  func.func @transform_1(%arg0: i32, %arg1: i32, %arg2: i32) -> (i32, i32) {
    %c0_i32 = arith.constant 0 : i32
    return %arg2, %arg1 : i32, i32
  }
  func.func @transform_2(%arg0: i32, %arg1: i32, %arg2: i32) -> (i32, i32) {
    %c0_i32 = arith.constant 0 : i32
    %c0_i32_0 = arith.constant 0 : i32
    return %c0_i32, %arg1 : i32, i32
  }
  func.func @transform_3(%arg0: i32, %arg1: i32, %arg2: i32) -> (i32, i32) {
    %c0_i32 = arith.constant 0 : i32
    return %arg0, %arg1 : i32, i32
  }
}

module attributes {stable_mosaic.version = 11 : i64} {
  func.func @linear_kernel(%arg0: i32, %arg1: i32, %arg2: i32, %arg3: memref<16x128xf32, #tpu.memory_space<vmem>>, %arg4: memref<128x128xf32, #tpu.memory_space<vmem>>, %arg5: memref<1x128xf32, #tpu.memory_space<vmem>>, %arg6: memref<16x128xf32, #tpu.memory_space<vmem>>, %arg7: memref<16x128xf32, #tpu.memory_space<vmem>>) attributes {dimension_semantics = [#tpu.dimension_semantics<parallel>, #tpu.dimension_semantics<parallel>, #tpu.dimension_semantics<arbitrary>], iteration_bounds = array<i64: 1, 3, 1>, scalar_prefetch = 0 : i64, scratch_operands = 1 : i64, tpu.core_type = #tpu.core_type<tc>, window_params = [{transform_indices = @transform_0, window_bounds = array<i64: 16, 128>}, {transform_indices = @transform_1, window_bounds = array<i64: 128, 128>}, {transform_indices = @transform_2, window_bounds = array<i64: 1, 128>}, {transform_indices = @transform_3, window_bounds = array<i64: 16, 128>}]} {
    %c0_i32 = arith.constant 0 : i32
    %0 = arith.cmpi eq, %arg2, %c0_i32 : i32
    %1 = arith.extui %0 : i1 to i32
    %c0_i32_0 = arith.constant 0 : i32
    %2 = arith.cmpi ne, %1, %c0_i32_0 : i32
    scf.if %2 {
      %cst_10 = arith.constant 0.000000e+00 : f32
      %12 = vector.broadcast %cst_10 : f32 to vector<16x128xf32>
      %c0_11 = arith.constant 0 : index
      %c0_12 = arith.constant 0 : index
      %13 = vector.load %arg7[%c0_11, %c0_12] : memref<16x128xf32, #tpu.memory_space<vmem>>, vector<16x128xf32>
      tpu.vector_store %arg7[%c0_11, %c0_12], %12 {strides = array<i32>} : memref<16x128xf32, #tpu.memory_space<vmem>>, vector<16x128xf32>,
    } else {
    }
    %c0 = arith.constant 0 : index
    %c0_1 = arith.constant 0 : index
    %3 = vector.load %arg7[%c0, %c0_1] : memref<16x128xf32, #tpu.memory_space<vmem>>, vector<16x128xf32>
    %c0_2 = arith.constant 0 : index
    %c0_3 = arith.constant 0 : index
    %4 = vector.load %arg3[%c0_2, %c0_3] : memref<16x128xf32, #tpu.memory_space<vmem>>, vector<16x128xf32>
    %c0_4 = arith.constant 0 : index
    %c0_5 = arith.constant 0 : index
    %5 = vector.load %arg4[%c0_4, %c0_5] : memref<128x128xf32, #tpu.memory_space<vmem>>, vector<128x128xf32>
    %cst = arith.constant dense<0.000000e+00> : vector<16x128xf32>
    %6 = tpu.matmul %4, %5, %cst {dimension_numbers = #tpu.dot_dimension_numbers<[1], [0], [0], [1], [0, 0, 1, 1], [], []>} : vector<16x128xf32>, vector<128x128xf32>, vector<16x128xf32> -> vector<16x128xf32>
    %7 = arith.addf %3, %6 : vector<16x128xf32>
    %c0_6 = arith.constant 0 : index
    %c0_7 = arith.constant 0 : index
    %8 = vector.load %arg7[%c0_6, %c0_7] : memref<16x128xf32, #tpu.memory_space<vmem>>, vector<16x128xf32>
    tpu.vector_store %arg7[%c0_6, %c0_7], %7 {strides = array<i32>} : memref<16x128xf32, #tpu.memory_space<vmem>>, vector<16x128xf32>,
    %c0_i32_8 = arith.constant 0 : i32
    %9 = arith.cmpi eq, %arg2, %c0_i32_8 : i32
    %10 = arith.extui %9 : i1 to i32
    %c0_i32_9 = arith.constant 0 : i32
    %11 = arith.cmpi ne, %10, %c0_i32_9 : i32
    scf.if %11 {
      %c0_10 = arith.constant 0 : index
      %c0_11 = arith.constant 0 : index
      %12 = vector.load %arg7[%c0_10, %c0_11] : memref<16x128xf32, #tpu.memory_space<vmem>>, vector<16x128xf32>
      %c0_12 = arith.constant 0 : index
      %c0_13 = arith.constant 0 : index
      %13 = vector.load %arg5[%c0_12, %c0_13] : memref<1x128xf32, #tpu.memory_space<vmem>>, vector<1x128xf32>
      %14 = vector.broadcast %13 : vector<1x128xf32> to vector<16x128xf32>
      %15 = arith.addf %12, %14 : vector<16x128xf32>
      %c0_14 = arith.constant 0 : index
      %c0_15 = arith.constant 0 : index
      %16 = vector.load %arg6[%c0_14, %c0_15] : memref<16x128xf32, #tpu.memory_space<vmem>>, vector<16x128xf32>
      tpu.vector_store %arg6[%c0_14, %c0_15], %15 {strides = array<i32>} : memref<16x128xf32, #tpu.memory_space<vmem>>, vector<16x128xf32>,
    } else {
    }
    return
  }
  func.func @transform_0(%arg0: i32, %arg1: i32, %arg2: i32) -> (i32, i32) {
    %c0_i32 = arith.constant 0 : i32
    return %arg0, %arg2 : i32, i32
  }
  func.func @transform_1(%arg0: i32, %arg1: i32, %arg2: i32) -> (i32, i32) {
    %c0_i32 = arith.constant 0 : i32
    return %arg2, %arg1 : i32, i32
  }
  func.func @transform_2(%arg0: i32, %arg1: i32, %arg2: i32) -> (i32, i32) {
    %c0_i32 = arith.constant 0 : i32
    %c0_i32_0 = arith.constant 0 : i32
    return %c0_i32, %arg1 : i32, i32
  }
  func.func @transform_3(%arg0: i32, %arg1: i32, %arg2: i32) -> (i32, i32) {
    %c0_i32 = arith.constant 0 : i32
    return %arg0, %arg1 : i32, i32
  }
}

module attributes {stable_mosaic.version = 11 : i64} {
  func.func @flash_attention_kernel(%arg0: i32, %arg1: i32, %arg2: i32, %arg3: memref<1x8x128xf32, #tpu.memory_space<vmem>>, %arg4: memref<1x8x128xf32, #tpu.memory_space<vmem>>, %arg5: memref<1x8x128xf32, #tpu.memory_space<vmem>>, %arg6: memref<1x8x128xf32, #tpu.memory_space<vmem>>, %arg7: memref<8x4xf32, #tpu.memory_space<vmem>>, %arg8: memref<8x4xf32, #tpu.memory_space<vmem>>, %arg9: memref<8x128xf32, #tpu.memory_space<vmem>>) attributes {dimension_semantics = [#tpu.dimension_semantics<parallel>, #tpu.dimension_semantics<parallel>, #tpu.dimension_semantics<arbitrary>], iteration_bounds = array<i64: 2, 1, 1>, scalar_prefetch = 0 : i64, scratch_operands = 3 : i64, tpu.core_type = #tpu.core_type<tc>, window_params = [{transform_indices = @transform_0, window_bounds = array<i64: 1, 8, 128>}, {transform_indices = @transform_1, window_bounds = array<i64: 1, 8, 128>}, {transform_indices = @transform_2, window_bounds = array<i64: 1, 8, 128>}, {transform_indices = @transform_3, window_bounds = array<i64: 1, 8, 128>}]} {
    %c0_i32 = arith.constant 0 : i32
    %0 = arith.cmpi eq, %arg2, %c0_i32 : i32
    %1 = arith.extui %0 : i1 to i32
    %c0_i32_0 = arith.constant 0 : i32
    %2 = arith.cmpi ne, %1, %c0_i32_0 : i32
    scf.if %2 {
      %cst_68 = arith.constant 0xFF800000 : f32
      %116 = vector.broadcast %cst_68 : f32 to vector<8x4xf32>
      %c0_69 = arith.constant 0 : index
      %c0_70 = arith.constant 0 : index
      %117 = vector.load %arg7[%c0_69, %c0_70] : memref<8x4xf32, #tpu.memory_space<vmem>>, vector<8x4xf32>
      tpu.vector_store %arg7[%c0_69, %c0_70], %116 {strides = array<i32>} : memref<8x4xf32, #tpu.memory_space<vmem>>, vector<8x4xf32>,
      %cst_71 = arith.constant 0.000000e+00 : f32
      %118 = vector.broadcast %cst_71 : f32 to vector<8x4xf32>
      %c0_72 = arith.constant 0 : index
      %c0_73 = arith.constant 0 : index
      %119 = vector.load %arg8[%c0_72, %c0_73] : memref<8x4xf32, #tpu.memory_space<vmem>>, vector<8x4xf32>
      tpu.vector_store %arg8[%c0_72, %c0_73], %118 {strides = array<i32>} : memref<8x4xf32, #tpu.memory_space<vmem>>, vector<8x4xf32>,
      %cst_74 = arith.constant 0.000000e+00 : f32
      %120 = vector.broadcast %cst_74 : f32 to vector<8x128xf32>
      %c0_75 = arith.constant 0 : index
      %c0_76 = arith.constant 0 : index
      %121 = vector.load %arg9[%c0_75, %c0_76] : memref<8x128xf32, #tpu.memory_space<vmem>>, vector<8x128xf32>
      tpu.vector_store %arg9[%c0_75, %c0_76], %120 {strides = array<i32>} : memref<8x128xf32, #tpu.memory_space<vmem>>, vector<8x128xf32>,
    } else {
    }
    %c0 = arith.constant 0 : index
    %c0_1 = arith.constant 0 : index
    %c0_2 = arith.constant 0 : index
    %3 = vector.load %arg3[%c0, %c0_1, %c0_2] : memref<1x8x128xf32, #tpu.memory_space<vmem>>, vector<1x8x128xf32>
    %4 = vector.shape_cast %3 : vector<1x8x128xf32> to vector<8x128xf32>
    %c0_3 = arith.constant 0 : index
    %c0_4 = arith.constant 0 : index
    %c0_5 = arith.constant 0 : index
    %5 = vector.load %arg4[%c0_3, %c0_4, %c0_5] : memref<1x8x128xf32, #tpu.memory_space<vmem>>, vector<1x8x128xf32>
    %6 = vector.shape_cast %5 : vector<1x8x128xf32> to vector<8x128xf32>
    %c0_6 = arith.constant 0 : index
    %c0_7 = arith.constant 0 : index
    %c0_8 = arith.constant 0 : index
    %7 = vector.load %arg5[%c0_6, %c0_7, %c0_8] : memref<1x8x128xf32, #tpu.memory_space<vmem>>, vector<1x8x128xf32>
    %8 = vector.shape_cast %7 : vector<1x8x128xf32> to vector<8x128xf32>
    %9 = vector.extract_strided_slice %4 {offsets = [0, 0], sizes = [8, 32], strides = [1, 1]} : vector<8x128xf32> to vector<8x32xf32>
    %10 = vector.extract_strided_slice %6 {offsets = [0, 0], sizes = [8, 32], strides = [1, 1]} : vector<8x128xf32> to vector<8x32xf32>
    %cst = arith.constant dense<0.000000e+00> : vector<8x8xf32>
    %11 = tpu.matmul %9, %10, %cst {dimension_numbers = #tpu.dot_dimension_numbers<[1], [1], [0], [0], [0, 0, 1, 0], [], []>} : vector<8x32xf32>, vector<8x32xf32>, vector<8x8xf32> -> vector<8x8xf32>
    %c0_9 = arith.constant 0 : index
    %c0_10 = arith.constant 0 : index
    %12 = vector.load %arg7[%c0_9, %c0_10] : memref<8x4xf32, #tpu.memory_space<vmem>>, vector<8x1xf32>
    %cst_11 = arith.constant dense<0xFF800000> : vector<8xf32>
    %13 = vector.multi_reduction <maximumf>, %11, %cst_11 [1] : vector<8x8xf32> to vector<8xf32>
    %14 = vector.shape_cast %13 : vector<8xf32> to vector<8x1xf32>
    %15 = arith.maximumf %12, %14 : vector<8x1xf32>
    %16 = arith.subf %12, %15 : vector<8x1xf32>
    %17 = math.exp %16 : vector<8x1xf32>
    %18 = vector.broadcast %15 : vector<8x1xf32> to vector<8x8xf32>
    %19 = arith.subf %11, %18 : vector<8x8xf32>
    %20 = math.exp %19 : vector<8x8xf32>
    %c0_12 = arith.constant 0 : index
    %c0_13 = arith.constant 0 : index
    %21 = vector.load %arg8[%c0_12, %c0_13] : memref<8x4xf32, #tpu.memory_space<vmem>>, vector<8x1xf32>
    %22 = arith.mulf %17, %21 : vector<8x1xf32>
    %cst_14 = arith.constant dense<0.000000e+00> : vector<8xf32>
    %23 = vector.multi_reduction <add>, %20, %cst_14 [1] : vector<8x8xf32> to vector<8xf32>
    %24 = vector.shape_cast %23 : vector<8xf32> to vector<8x1xf32>
    %25 = arith.addf %22, %24 : vector<8x1xf32>
    %c0_15 = arith.constant 0 : index
    %c0_16 = arith.constant 0 : index
    %26 = vector.load %arg8[%c0_15, %c0_16] : memref<8x4xf32, #tpu.memory_space<vmem>>, vector<8x1xf32>
    tpu.vector_store %arg8[%c0_15, %c0_16], %25 {strides = array<i32>} : memref<8x4xf32, #tpu.memory_space<vmem>>, vector<8x1xf32>,
    %c0_17 = arith.constant 0 : index
    %c0_18 = arith.constant 0 : index
    %27 = vector.load %arg7[%c0_17, %c0_18] : memref<8x4xf32, #tpu.memory_space<vmem>>, vector<8x1xf32>
    tpu.vector_store %arg7[%c0_17, %c0_18], %15 {strides = array<i32>} : memref<8x4xf32, #tpu.memory_space<vmem>>, vector<8x1xf32>,
    %28 = vector.extract_strided_slice %8 {offsets = [0, 0], sizes = [8, 32], strides = [1, 1]} : vector<8x128xf32> to vector<8x32xf32>
    %cst_19 = arith.constant dense<0.000000e+00> : vector<8x32xf32>
    %29 = tpu.matmul %20, %28, %cst_19 {dimension_numbers = #tpu.dot_dimension_numbers<[1], [0], [0], [1], [0, 0, 1, 1], [], []>} : vector<8x8xf32>, vector<8x32xf32>, vector<8x32xf32> -> vector<8x32xf32>
    %c0_20 = arith.constant 0 : index
    %c0_21 = arith.constant 0 : index
    %30 = vector.load %arg9[%c0_20, %c0_21] : memref<8x128xf32, #tpu.memory_space<vmem>>, vector<8x32xf32>
    %31 = vector.broadcast %17 : vector<8x1xf32> to vector<8x32xf32>
    %32 = arith.mulf %31, %30 : vector<8x32xf32>
    %33 = arith.addf %32, %29 : vector<8x32xf32>
    %c0_22 = arith.constant 0 : index
    %c0_23 = arith.constant 0 : index
    %34 = vector.load %arg9[%c0_22, %c0_23] : memref<8x128xf32, #tpu.memory_space<vmem>>, vector<8x32xf32>
    tpu.vector_store %arg9[%c0_22, %c0_23], %33 {strides = array<i32>} : memref<8x128xf32, #tpu.memory_space<vmem>>, vector<8x32xf32>,
    %35 = vector.extract_strided_slice %4 {offsets = [0, 32], sizes = [8, 32], strides = [1, 1]} : vector<8x128xf32> to vector<8x32xf32>
    %36 = vector.extract_strided_slice %6 {offsets = [0, 32], sizes = [8, 32], strides = [1, 1]} : vector<8x128xf32> to vector<8x32xf32>
    %cst_24 = arith.constant dense<0.000000e+00> : vector<8x8xf32>
    %37 = tpu.matmul %35, %36, %cst_24 {dimension_numbers = #tpu.dot_dimension_numbers<[1], [1], [0], [0], [0, 0, 1, 0], [], []>} : vector<8x32xf32>, vector<8x32xf32>, vector<8x8xf32> -> vector<8x8xf32>
    %c0_25 = arith.constant 0 : index
    %c1 = arith.constant 1 : index
    %38 = vector.load %arg7[%c0_25, %c1] : memref<8x4xf32, #tpu.memory_space<vmem>>, vector<8x1xf32>
    %cst_26 = arith.constant dense<0xFF800000> : vector<8xf32>
    %39 = vector.multi_reduction <maximumf>, %37, %cst_26 [1] : vector<8x8xf32> to vector<8xf32>
    %40 = vector.shape_cast %39 : vector<8xf32> to vector<8x1xf32>
    %41 = arith.maximumf %38, %40 : vector<8x1xf32>
    %42 = arith.subf %38, %41 : vector<8x1xf32>
    %43 = math.exp %42 : vector<8x1xf32>
    %44 = vector.broadcast %41 : vector<8x1xf32> to vector<8x8xf32>
    %45 = arith.subf %37, %44 : vector<8x8xf32>
    %46 = math.exp %45 : vector<8x8xf32>
    %c0_27 = arith.constant 0 : index
    %c1_28 = arith.constant 1 : index
    %47 = vector.load %arg8[%c0_27, %c1_28] : memref<8x4xf32, #tpu.memory_space<vmem>>, vector<8x1xf32>
    %48 = arith.mulf %43, %47 : vector<8x1xf32>
    %cst_29 = arith.constant dense<0.000000e+00> : vector<8xf32>
    %49 = vector.multi_reduction <add>, %46, %cst_29 [1] : vector<8x8xf32> to vector<8xf32>
    %50 = vector.shape_cast %49 : vector<8xf32> to vector<8x1xf32>
    %51 = arith.addf %48, %50 : vector<8x1xf32>
    %c0_30 = arith.constant 0 : index
    %c1_31 = arith.constant 1 : index
    %52 = vector.load %arg8[%c0_30, %c1_31] : memref<8x4xf32, #tpu.memory_space<vmem>>, vector<8x1xf32>
    tpu.vector_store %arg8[%c0_30, %c1_31], %51 {strides = array<i32>} : memref<8x4xf32, #tpu.memory_space<vmem>>, vector<8x1xf32>,
    %c0_32 = arith.constant 0 : index
    %c1_33 = arith.constant 1 : index
    %53 = vector.load %arg7[%c0_32, %c1_33] : memref<8x4xf32, #tpu.memory_space<vmem>>, vector<8x1xf32>
    tpu.vector_store %arg7[%c0_32, %c1_33], %41 {strides = array<i32>} : memref<8x4xf32, #tpu.memory_space<vmem>>, vector<8x1xf32>,
    %54 = vector.extract_strided_slice %8 {offsets = [0, 32], sizes = [8, 32], strides = [1, 1]} : vector<8x128xf32> to vector<8x32xf32>
    %cst_34 = arith.constant dense<0.000000e+00> : vector<8x32xf32>
    %55 = tpu.matmul %46, %54, %cst_34 {dimension_numbers = #tpu.dot_dimension_numbers<[1], [0], [0], [1], [0, 0, 1, 1], [], []>} : vector<8x8xf32>, vector<8x32xf32>, vector<8x32xf32> -> vector<8x32xf32>
    %c0_35 = arith.constant 0 : index
    %c32 = arith.constant 32 : index
    %56 = vector.load %arg9[%c0_35, %c32] : memref<8x128xf32, #tpu.memory_space<vmem>>, vector<8x32xf32>
    %57 = vector.broadcast %43 : vector<8x1xf32> to vector<8x32xf32>
    %58 = arith.mulf %57, %56 : vector<8x32xf32>
    %59 = arith.addf %58, %55 : vector<8x32xf32>
    %c0_36 = arith.constant 0 : index
    %c32_37 = arith.constant 32 : index
    %60 = vector.load %arg9[%c0_36, %c32_37] : memref<8x128xf32, #tpu.memory_space<vmem>>, vector<8x32xf32>
    tpu.vector_store %arg9[%c0_36, %c32_37], %59 {strides = array<i32>} : memref<8x128xf32, #tpu.memory_space<vmem>>, vector<8x32xf32>,
    %61 = vector.extract_strided_slice %4 {offsets = [0, 64], sizes = [8, 32], strides = [1, 1]} : vector<8x128xf32> to vector<8x32xf32>
    %62 = vector.extract_strided_slice %6 {offsets = [0, 64], sizes = [8, 32], strides = [1, 1]} : vector<8x128xf32> to vector<8x32xf32>
    %cst_38 = arith.constant dense<0.000000e+00> : vector<8x8xf32>
    %63 = tpu.matmul %61, %62, %cst_38 {dimension_numbers = #tpu.dot_dimension_numbers<[1], [1], [0], [0], [0, 0, 1, 0], [], []>} : vector<8x32xf32>, vector<8x32xf32>, vector<8x8xf32> -> vector<8x8xf32>
    %c0_39 = arith.constant 0 : index
    %c2 = arith.constant 2 : index
    %64 = vector.load %arg7[%c0_39, %c2] : memref<8x4xf32, #tpu.memory_space<vmem>>, vector<8x1xf32>
    %cst_40 = arith.constant dense<0xFF800000> : vector<8xf32>
    %65 = vector.multi_reduction <maximumf>, %63, %cst_40 [1] : vector<8x8xf32> to vector<8xf32>
    %66 = vector.shape_cast %65 : vector<8xf32> to vector<8x1xf32>
    %67 = arith.maximumf %64, %66 : vector<8x1xf32>
    %68 = arith.subf %64, %67 : vector<8x1xf32>
    %69 = math.exp %68 : vector<8x1xf32>
    %70 = vector.broadcast %67 : vector<8x1xf32> to vector<8x8xf32>
    %71 = arith.subf %63, %70 : vector<8x8xf32>
    %72 = math.exp %71 : vector<8x8xf32>
    %c0_41 = arith.constant 0 : index
    %c2_42 = arith.constant 2 : index
    %73 = vector.load %arg8[%c0_41, %c2_42] : memref<8x4xf32, #tpu.memory_space<vmem>>, vector<8x1xf32>
    %74 = arith.mulf %69, %73 : vector<8x1xf32>
    %cst_43 = arith.constant dense<0.000000e+00> : vector<8xf32>
    %75 = vector.multi_reduction <add>, %72, %cst_43 [1] : vector<8x8xf32> to vector<8xf32>
    %76 = vector.shape_cast %75 : vector<8xf32> to vector<8x1xf32>
    %77 = arith.addf %74, %76 : vector<8x1xf32>
    %c0_44 = arith.constant 0 : index
    %c2_45 = arith.constant 2 : index
    %78 = vector.load %arg8[%c0_44, %c2_45] : memref<8x4xf32, #tpu.memory_space<vmem>>, vector<8x1xf32>
    tpu.vector_store %arg8[%c0_44, %c2_45], %77 {strides = array<i32>} : memref<8x4xf32, #tpu.memory_space<vmem>>, vector<8x1xf32>,
    %c0_46 = arith.constant 0 : index
    %c2_47 = arith.constant 2 : index
    %79 = vector.load %arg7[%c0_46, %c2_47] : memref<8x4xf32, #tpu.memory_space<vmem>>, vector<8x1xf32>
    tpu.vector_store %arg7[%c0_46, %c2_47], %67 {strides = array<i32>} : memref<8x4xf32, #tpu.memory_space<vmem>>, vector<8x1xf32>,
    %80 = vector.extract_strided_slice %8 {offsets = [0, 64], sizes = [8, 32], strides = [1, 1]} : vector<8x128xf32> to vector<8x32xf32>
    %cst_48 = arith.constant dense<0.000000e+00> : vector<8x32xf32>
    %81 = tpu.matmul %72, %80, %cst_48 {dimension_numbers = #tpu.dot_dimension_numbers<[1], [0], [0], [1], [0, 0, 1, 1], [], []>} : vector<8x8xf32>, vector<8x32xf32>, vector<8x32xf32> -> vector<8x32xf32>
    %c0_49 = arith.constant 0 : index
    %c64 = arith.constant 64 : index
    %82 = vector.load %arg9[%c0_49, %c64] : memref<8x128xf32, #tpu.memory_space<vmem>>, vector<8x32xf32>
    %83 = vector.broadcast %69 : vector<8x1xf32> to vector<8x32xf32>
    %84 = arith.mulf %83, %82 : vector<8x32xf32>
    %85 = arith.addf %84, %81 : vector<8x32xf32>
    %c0_50 = arith.constant 0 : index
    %c64_51 = arith.constant 64 : index
    %86 = vector.load %arg9[%c0_50, %c64_51] : memref<8x128xf32, #tpu.memory_space<vmem>>, vector<8x32xf32>
    tpu.vector_store %arg9[%c0_50, %c64_51], %85 {strides = array<i32>} : memref<8x128xf32, #tpu.memory_space<vmem>>, vector<8x32xf32>,
    %87 = vector.extract_strided_slice %4 {offsets = [0, 96], sizes = [8, 32], strides = [1, 1]} : vector<8x128xf32> to vector<8x32xf32>
    %88 = vector.extract_strided_slice %6 {offsets = [0, 96], sizes = [8, 32], strides = [1, 1]} : vector<8x128xf32> to vector<8x32xf32>
    %cst_52 = arith.constant dense<0.000000e+00> : vector<8x8xf32>
    %89 = tpu.matmul %87, %88, %cst_52 {dimension_numbers = #tpu.dot_dimension_numbers<[1], [1], [0], [0], [0, 0, 1, 0], [], []>} : vector<8x32xf32>, vector<8x32xf32>, vector<8x8xf32> -> vector<8x8xf32>
    %c0_53 = arith.constant 0 : index
    %c3 = arith.constant 3 : index
    %90 = vector.load %arg7[%c0_53, %c3] : memref<8x4xf32, #tpu.memory_space<vmem>>, vector<8x1xf32>
    %cst_54 = arith.constant dense<0xFF800000> : vector<8xf32>
    %91 = vector.multi_reduction <maximumf>, %89, %cst_54 [1] : vector<8x8xf32> to vector<8xf32>
    %92 = vector.shape_cast %91 : vector<8xf32> to vector<8x1xf32>
    %93 = arith.maximumf %90, %92 : vector<8x1xf32>
    %94 = arith.subf %90, %93 : vector<8x1xf32>
    %95 = math.exp %94 : vector<8x1xf32>
    %96 = vector.broadcast %93 : vector<8x1xf32> to vector<8x8xf32>
    %97 = arith.subf %89, %96 : vector<8x8xf32>
    %98 = math.exp %97 : vector<8x8xf32>
    %c0_55 = arith.constant 0 : index
    %c3_56 = arith.constant 3 : index
    %99 = vector.load %arg8[%c0_55, %c3_56] : memref<8x4xf32, #tpu.memory_space<vmem>>, vector<8x1xf32>
    %100 = arith.mulf %95, %99 : vector<8x1xf32>
    %cst_57 = arith.constant dense<0.000000e+00> : vector<8xf32>
    %101 = vector.multi_reduction <add>, %98, %cst_57 [1] : vector<8x8xf32> to vector<8xf32>
    %102 = vector.shape_cast %101 : vector<8xf32> to vector<8x1xf32>
    %103 = arith.addf %100, %102 : vector<8x1xf32>
    %c0_58 = arith.constant 0 : index
    %c3_59 = arith.constant 3 : index
    %104 = vector.load %arg8[%c0_58, %c3_59] : memref<8x4xf32, #tpu.memory_space<vmem>>, vector<8x1xf32>
    tpu.vector_store %arg8[%c0_58, %c3_59], %103 {strides = array<i32>} : memref<8x4xf32, #tpu.memory_space<vmem>>, vector<8x1xf32>,
    %c0_60 = arith.constant 0 : index
    %c3_61 = arith.constant 3 : index
    %105 = vector.load %arg7[%c0_60, %c3_61] : memref<8x4xf32, #tpu.memory_space<vmem>>, vector<8x1xf32>
    tpu.vector_store %arg7[%c0_60, %c3_61], %93 {strides = array<i32>} : memref<8x4xf32, #tpu.memory_space<vmem>>, vector<8x1xf32>,
    %106 = vector.extract_strided_slice %8 {offsets = [0, 96], sizes = [8, 32], strides = [1, 1]} : vector<8x128xf32> to vector<8x32xf32>
    %cst_62 = arith.constant dense<0.000000e+00> : vector<8x32xf32>
    %107 = tpu.matmul %98, %106, %cst_62 {dimension_numbers = #tpu.dot_dimension_numbers<[1], [0], [0], [1], [0, 0, 1, 1], [], []>} : vector<8x8xf32>, vector<8x32xf32>, vector<8x32xf32> -> vector<8x32xf32>
    %c0_63 = arith.constant 0 : index
    %c96 = arith.constant 96 : index
    %108 = vector.load %arg9[%c0_63, %c96] : memref<8x128xf32, #tpu.memory_space<vmem>>, vector<8x32xf32>
    %109 = vector.broadcast %95 : vector<8x1xf32> to vector<8x32xf32>
    %110 = arith.mulf %109, %108 : vector<8x32xf32>
    %111 = arith.addf %110, %107 : vector<8x32xf32>
    %c0_64 = arith.constant 0 : index
    %c96_65 = arith.constant 96 : index
    %112 = vector.load %arg9[%c0_64, %c96_65] : memref<8x128xf32, #tpu.memory_space<vmem>>, vector<8x32xf32>
    tpu.vector_store %arg9[%c0_64, %c96_65], %111 {strides = array<i32>} : memref<8x128xf32, #tpu.memory_space<vmem>>, vector<8x32xf32>,
    %c0_i32_66 = arith.constant 0 : i32
    %113 = arith.cmpi eq, %arg2, %c0_i32_66 : i32
    %114 = arith.extui %113 : i1 to i32
    %c0_i32_67 = arith.constant 0 : i32
    %115 = arith.cmpi ne, %114, %c0_i32_67 : i32
    scf.if %115 {
      %c0_68 = arith.constant 0 : index
      %c0_69 = arith.constant 0 : index
      %116 = vector.load %arg8[%c0_68, %c0_69] : memref<8x4xf32, #tpu.memory_space<vmem>>, vector<8x4xf32>
      %117 = tpu.reciprocal %116 {approx = true} : vector<8x4xf32> -> vector<8x4xf32>
      %c0_70 = arith.constant 0 : index
      %c0_71 = arith.constant 0 : index
      %118 = vector.load %arg9[%c0_70, %c0_71] : memref<8x128xf32, #tpu.memory_space<vmem>>, vector<8x32xf32>
      %119 = vector.extract_strided_slice %117 {offsets = [0, 0], sizes = [8, 1], strides = [1, 1]} : vector<8x4xf32> to vector<8x1xf32>
      %120 = vector.broadcast %119 : vector<8x1xf32> to vector<8x32xf32>
      %121 = arith.mulf %118, %120 : vector<8x32xf32>
      %c0_72 = arith.constant 0 : index
      %c0_73 = arith.constant 0 : index
      %122 = vector.load %arg9[%c0_72, %c0_73] : memref<8x128xf32, #tpu.memory_space<vmem>>, vector<8x32xf32>
      tpu.vector_store %arg9[%c0_72, %c0_73], %121 {strides = array<i32>} : memref<8x128xf32, #tpu.memory_space<vmem>>, vector<8x32xf32>,
      %c0_74 = arith.constant 0 : index
      %c32_75 = arith.constant 32 : index
      %123 = vector.load %arg9[%c0_74, %c32_75] : memref<8x128xf32, #tpu.memory_space<vmem>>, vector<8x32xf32>
      %124 = vector.extract_strided_slice %117 {offsets = [0, 1], sizes = [8, 1], strides = [1, 1]} : vector<8x4xf32> to vector<8x1xf32>
      %125 = vector.broadcast %124 : vector<8x1xf32> to vector<8x32xf32>
      %126 = arith.mulf %123, %125 : vector<8x32xf32>
      %c0_76 = arith.constant 0 : index
      %c32_77 = arith.constant 32 : index
      %127 = vector.load %arg9[%c0_76, %c32_77] : memref<8x128xf32, #tpu.memory_space<vmem>>, vector<8x32xf32>
      tpu.vector_store %arg9[%c0_76, %c32_77], %126 {strides = array<i32>} : memref<8x128xf32, #tpu.memory_space<vmem>>, vector<8x32xf32>,
      %c0_78 = arith.constant 0 : index
      %c64_79 = arith.constant 64 : index
      %128 = vector.load %arg9[%c0_78, %c64_79] : memref<8x128xf32, #tpu.memory_space<vmem>>, vector<8x32xf32>
      %129 = vector.extract_strided_slice %117 {offsets = [0, 2], sizes = [8, 1], strides = [1, 1]} : vector<8x4xf32> to vector<8x1xf32>
      %130 = vector.broadcast %129 : vector<8x1xf32> to vector<8x32xf32>
      %131 = arith.mulf %128, %130 : vector<8x32xf32>
      %c0_80 = arith.constant 0 : index
      %c64_81 = arith.constant 64 : index
      %132 = vector.load %arg9[%c0_80, %c64_81] : memref<8x128xf32, #tpu.memory_space<vmem>>, vector<8x32xf32>
      tpu.vector_store %arg9[%c0_80, %c64_81], %131 {strides = array<i32>} : memref<8x128xf32, #tpu.memory_space<vmem>>, vector<8x32xf32>,
      %c0_82 = arith.constant 0 : index
      %c96_83 = arith.constant 96 : index
      %133 = vector.load %arg9[%c0_82, %c96_83] : memref<8x128xf32, #tpu.memory_space<vmem>>, vector<8x32xf32>
      %134 = vector.extract_strided_slice %117 {offsets = [0, 3], sizes = [8, 1], strides = [1, 1]} : vector<8x4xf32> to vector<8x1xf32>
      %135 = vector.broadcast %134 : vector<8x1xf32> to vector<8x32xf32>
      %136 = arith.mulf %133, %135 : vector<8x32xf32>
      %c0_84 = arith.constant 0 : index
      %c96_85 = arith.constant 96 : index
      %137 = vector.load %arg9[%c0_84, %c96_85] : memref<8x128xf32, #tpu.memory_space<vmem>>, vector<8x32xf32>
      tpu.vector_store %arg9[%c0_84, %c96_85], %136 {strides = array<i32>} : memref<8x128xf32, #tpu.memory_space<vmem>>, vector<8x32xf32>,
      %c0_86 = arith.constant 0 : index
      %c0_87 = arith.constant 0 : index
      %138 = vector.load %arg9[%c0_86, %c0_87] : memref<8x128xf32, #tpu.memory_space<vmem>>, vector<8x128xf32>
      %c0_88 = arith.constant 0 : index
      %c0_89 = arith.constant 0 : index
      %c0_90 = arith.constant 0 : index
      %139 = vector.load %arg6[%c0_88, %c0_89, %c0_90] : memref<1x8x128xf32, #tpu.memory_space<vmem>>, vector<1x8x128xf32>
      %140 = vector.shape_cast %139 : vector<1x8x128xf32> to vector<8x128xf32>
      %141 = vector.shape_cast %138 : vector<8x128xf32> to vector<1x8x128xf32>
      tpu.vector_store %arg6[%c0_88, %c0_89, %c0_90], %141 {strides = array<i32>} : memref<1x8x128xf32, #tpu.memory_space<vmem>>, vector<1x8x128xf32>,
    } else {
    }
    return
  }
  func.func @transform_0(%arg0: i32, %arg1: i32, %arg2: i32) -> (i32, i32, i32) {
    %c0_i32 = arith.constant 0 : i32
    %c0_i32_0 = arith.constant 0 : i32
    return %arg0, %arg1, %c0_i32 : i32, i32, i32
  }
  func.func @transform_1(%arg0: i32, %arg1: i32, %arg2: i32) -> (i32, i32, i32) {
    %c1_i32 = arith.constant 1 : i32
    %c0_i32 = arith.constant 0 : i32
    return %arg0, %arg2, %c1_i32 : i32, i32, i32
  }
  func.func @transform_2(%arg0: i32, %arg1: i32, %arg2: i32) -> (i32, i32, i32) {
    %c2_i32 = arith.constant 2 : i32
    %c0_i32 = arith.constant 0 : i32
    return %arg0, %arg2, %c2_i32 : i32, i32, i32
  }
  func.func @transform_3(%arg0: i32, %arg1: i32, %arg2: i32) -> (i32, i32, i32) {
    %c0_i32 = arith.constant 0 : i32
    %c0_i32_0 = arith.constant 0 : i32
    return %arg0, %arg1, %c0_i32 : i32, i32, i32
  }
}

</mosaic_0001>

<llo_original>
// kernel: multi_head_attention.3
$region0: #{multi_head_attention.3}
  #allocation0 [shape = 'u32[]', space=smem, size = 0x4, offset = 0x4, fixed_abs, tag = 'smem constant byte address 0x4 - core index']
  #allocation1 [shape = 'u32[144,128]{1,0:T(1,128)}', space=vmem, size = 0x12000, scoped, tag = 'internal scratch']
  #allocation2 [shape = 'f32[16,128]{1,0:T(8,128)}', space=vmem, size = 0x2000, scoped, tag = 'scratch operand']
  %s0 = inlined_call_operand.vmem [shape: f32[16,128], index: 0, kind: input, shape index: {}]
  %s1 = inlined_call_operand.hbm [shape: f32[128,384], index: 1, kind: input, shape index: {}]
  %s2 = inlined_call_operand.vmem [shape: f32[1,384], index: 2, kind: input, shape index: {}]
  %s3 = inlined_call_operand.vmem [shape: f32[16,384], index: 3, kind: output, shape index: {}]
  %s4 = sld [smem:[#allocation0]]
  $region91: #{multi_head_attention.3} parent=0
    _
  %s6 = ssub.s32 1, %s4
  %s7 = scalar_select 0, %s6, %s4
  $region1: #{multi_head_attention.3} parent=0
    #allocation3 [shape = 'u8[131072]{0}', space=vmem, size = 0x20000, scoped, tag = 'input window, operand 1']
    #allocation4 [shape = 's32[2]{0}', space=sflag, size = 0x8, scoped, tag = 'scoped memory for multi_head_attention.3']
    #allocation5 [shape = 'u8[16384]{0}', space=vmem, size = 0x4000, scoped, tag = 'output window, operand 0']
    %8 = vsyncpa [#allocation4], 0
    %s9 = scalar_lea.sflag [#allocation4], 1
    %10 = vsyncpa %s9, 0
    loop: start=0, step=1, limit=5
    $region2: #{multi_head_attention.3} parent=1 // loop_pre_header
      _
    $region3: #{multi_head_attention.3} parent=1 // loop_header
      %s12 = sphi 0, %s16
      %p13 = scmp.ge.s32.totalorder %s12, 5
      %s19 = sphi 0, %s38
      %s20 = sphi 0, %s34
      %s21 = sphi 0, %s30
      %s22 = sphi 0, %s19
      %s23 = sphi 0, %s20
      %s24 = sphi 0, %s21
      %s25 = sphi 0, %s22
      %s26 = sphi 0, %s23
      %s27 = sphi 0, %s24
      %s43 = sphi 0, %s45
      %s46 = sphi 0, %s43
      %s47 = sphi 0, %s46
      %s63 = sphi 0, %s47
      %s71 = sphi 0, %s73
      %s74 = sphi 0, %s71
      %s75 = sphi 0, %s74
      %s91 = sphi 0, %s75
      %s97 = sphi 0, %s99
      %s100 = sphi 0, %s97
      %s101 = sphi 0, %s100
      %s117 = sphi 0, %s101
      %s125 = sphi 0, %s127
      %s128 = sphi 0, %s125
      %s129 = sphi 0, %s128
      %s145 = sphi 0, %s129
    $region4: #{multi_head_attention.3} parent=1 // loop_header_branch
      %15 = sbr.rel (%p13) target = $region8
    $region5: #{multi_head_attention.3} parent=1 // loop_body
      %s17 = ssub.s32 %s12, 1
      %s18 = ssub.s32 %s12, 2
      %s28 = sadd.s32 1, %s21
      %p29 = scmp.ge.s32.totalorder %s28, 1
      %s30 = scalar_select %p29, 0, %s28
      %s31 = sadd.s32 1, %s20
      %s32 = scalar_select %p29, %s31, %s20
      %p33 = scmp.ge.s32.totalorder %s32, 3
      %s34 = scalar_select %p33, 0, %s32
      %s35 = sadd.s32 1, %s19
      %s36 = scalar_select %p33, %s35, %s19
      %p37 = scmp.ge.s32.totalorder %s36, 1
      %s38 = scalar_select %p37, 0, %s36
      %s39 = ssub.s32 %s19, %s38
      %s40 = ssub.s32 %s21, %s30
      %s41 = sor.u32 %s39, %s40
      %p42 = scmp.eq.s32.totalorder %s41, 0
      %s44 = sadd.s32 %s43, 1
      %s45 = scalar_select %p42, %s43, %s44
      %p48 = pneg %p42
      %p49 = scmp.eq.s32.totalorder %s12, 2
      %p50 = por %p48, %p49
      %p51 = scmp.ne.s32.totalorder %s43, %s46
      %p52 = scmp.eq.s32.totalorder %s12, 0
      %p53 = por %p51, %p52
      %p54 = scmp.ne.s32.totalorder %s43, %s46
      %p55 = scmp.eq.s32.totalorder %s17, 2
      %p56 = por %p54, %p55
      %p57 = scmp.ne.s32.totalorder %s46, %s47
      %p58 = scmp.eq.s32.totalorder %s17, 0
      %p59 = por %p57, %p58
      %p60 = scmp.ne.s32.totalorder %s46, %s47
      %p61 = scmp.eq.s32.totalorder %s18, 2
      %p62 = por %p60, %p61
      %p64 = scmp.ne.s32.totalorder %s47, %s63
      %p65 = scmp.eq.s32.totalorder %s18, 0
      %p66 = por %p64, %p65
      %s67 = ssub.s32 %s21, %s30
      %s68 = ssub.s32 %s20, %s34
      %s69 = sor.u32 %s67, %s68
      %p70 = scmp.eq.s32.totalorder %s69, 0
      %s72 = sadd.s32 %s71, 1
      %s73 = scalar_select %p70, %s71, %s72
      %p76 = pneg %p70
      %p77 = scmp.eq.s32.totalorder %s12, 2
      %p78 = por %p76, %p77
      %p79 = scmp.ne.s32.totalorder %s71, %s74
      %p80 = scmp.eq.s32.totalorder %s12, 0
      %p81 = por %p79, %p80
      %p82 = scmp.ne.s32.totalorder %s71, %s74
      %p83 = scmp.eq.s32.totalorder %s17, 2
      %p84 = por %p82, %p83
      %p85 = scmp.ne.s32.totalorder %s74, %s75
      %p86 = scmp.eq.s32.totalorder %s17, 0
      %p87 = por %p85, %p86
      %p88 = scmp.ne.s32.totalorder %s74, %s75
      %p89 = scmp.eq.s32.totalorder %s18, 2
      %p90 = por %p88, %p89
      %p92 = scmp.ne.s32.totalorder %s75, %s91
      %p93 = scmp.eq.s32.totalorder %s18, 0
      %p94 = por %p92, %p93
      %s95 = ssub.s32 %s20, %s34
      %p96 = scmp.eq.s32.totalorder %s95, 0
      %s98 = sadd.s32 %s97, 1
      %s99 = scalar_select %p96, %s97, %s98
      %p102 = pneg %p96
      %p103 = scmp.eq.s32.totalorder %s12, 2
      %p104 = por %p102, %p103
      %p105 = scmp.ne.s32.totalorder %s97, %s100
      %p106 = scmp.eq.s32.totalorder %s12, 0
      %p107 = por %p105, %p106
      %p108 = scmp.ne.s32.totalorder %s97, %s100
      %p109 = scmp.eq.s32.totalorder %s17, 2
      %p110 = por %p108, %p109
      %p111 = scmp.ne.s32.totalorder %s100, %s101
      %p112 = scmp.eq.s32.totalorder %s17, 0
      %p113 = por %p111, %p112
      %p114 = scmp.ne.s32.totalorder %s100, %s101
      %p115 = scmp.eq.s32.totalorder %s18, 2
      %p116 = por %p114, %p115
      %p118 = scmp.ne.s32.totalorder %s101, %s117
      %p119 = scmp.eq.s32.totalorder %s18, 0
      %p120 = por %p118, %p119
      %s121 = ssub.s32 %s19, %s38
      %s122 = ssub.s32 %s20, %s34
      %s123 = sor.u32 %s121, %s122
      %p124 = scmp.eq.s32.totalorder %s123, 0
      %s126 = sadd.s32 %s125, 1
      %s127 = scalar_select %p124, %s125, %s126
      %p130 = pneg %p124
      %p131 = scmp.eq.s32.totalorder %s12, 2
      %p132 = por %p130, %p131
      %p133 = scmp.ne.s32.totalorder %s125, %s128
      %p134 = scmp.eq.s32.totalorder %s12, 0
      %p135 = por %p133, %p134
      %p136 = scmp.ne.s32.totalorder %s125, %s128
      %p137 = scmp.eq.s32.totalorder %s17, 2
      %p138 = por %p136, %p137
      %p139 = scmp.ne.s32.totalorder %s128, %s129
      %p140 = scmp.eq.s32.totalorder %s17, 0
      %p141 = por %p139, %p140
      %p142 = scmp.ne.s32.totalorder %s128, %s129
      %p143 = scmp.eq.s32.totalorder %s18, 2
      %p144 = por %p142, %p143
      %p146 = scmp.ne.s32.totalorder %s129, %s145
      %p147 = scmp.eq.s32.totalorder %s18, 0
      %p148 = por %p146, %p147
      %p149 = scmp.le.s32.totalorder 1, %s12
      %p150 = scmp.lt.s32.totalorder %s12, 4
      %p151 = pnand %p149, %p150
      %p152 = pneg %p151
      // Predicated region
      $region9: #{multi_head_attention.3} parent=5 // pred_check
        _
      $region10: #{multi_head_attention.3} parent=5 // pred_check_branch
        %154 = sbr.rel (%p151) target = $region12
      $region11: #{multi_head_attention.3} parent=5 // pred_region
        %s155 = ssub.s32 %s12, 1
        // Predicated region
        $region13: #{multi_head_attention.3} parent=11 // pred_check
          %p156 = pneg %p59
        $region14: #{multi_head_attention.3} parent=11 // pred_check_branch
          %158 = sbr.rel (%p156) target = $region16
        $region15: #{multi_head_attention.3} parent=11 // pred_region
          %s159 = smul.u32 2, %s22
          %p160 = scmp.lt.s32.totalorder %s159, 1
          %s161 = scalar_select %p160, %s159, 1
          %p162 = scmp.lt.s32.totalorder %s24, 0
          %s163 = scalar_select %p162, %s24, 0
          %s164 = sadd.s32 %s163, %s161
          %s165 = smul.addr %s164, 8
          %s166 = scalar_lea.vmem %s0, %s165
          %s167 = smul.u32 2, %s22
        $region16: #{multi_head_attention.3} parent=11 // pred_fallthru
          _
      $region12: #{multi_head_attention.3} parent=5 // pred_fallthru
        _
      %p168 = scmp.lt.s32.totalorder %s12, 3
      // Predicated region
      $region17: #{multi_head_attention.3} parent=5 // pred_check
        %p169 = pneg %p168
      $region18: #{multi_head_attention.3} parent=5 // pred_check_branch
        %171 = sbr.rel (%p169) target = $region20
      $region19: #{multi_head_attention.3} parent=5 // pred_region
        // Predicated region
        $region21: #{multi_head_attention.3} parent=19 // pred_check
          %p172 = pneg %p81
        $region22: #{multi_head_attention.3} parent=19 // pred_check_branch
          %174 = sbr.rel (%p172) target = $region24
        $region23: #{multi_head_attention.3} parent=19 // pred_region
          %s175 = sand.u32 %s71, 1
          %s176 = scalar_lea.sflag [#allocation4], %s175
          %s177 = sand.u32 %s71, 1
          %s178 = smul.addr %s177, 128
          %s179 = scalar_lea.vmem [#allocation3], %s178
          %s180 = smul.u32 16, %s21
          %s182 = ssub.s32 2048, 2048
          %183 = vsyncadd %s176, %s182
          %s184 = smul.addr %s180, 3
          %s185 = sadd.s32 %s20, %s184
          %s186 = smul.addr %s185, 128
          %s187 = scalar_lea.hbm %s1, %s186
          %s188 = sshll.u32 %s179, 4
          %s189 = int_to_ptr.vmem [resolvable:$true] %s188
          %194 = dma.hbm_to_vmem [thread:$0]  %s187, 2048, %s189, %s176, 384, 128, 8
        $region24: #{multi_head_attention.3} parent=19 // pred_fallthru
          _
        // Predicated region
        $region25: #{multi_head_attention.3} parent=19 // pred_check
          %p195 = pneg %p107
        $region26: #{multi_head_attention.3} parent=19 // pred_check_branch
          %197 = sbr.rel (%p195) target = $region28
        $region27: #{multi_head_attention.3} parent=19 // pred_region
          %p198 = scmp.lt.s32.totalorder %s20, 2
          %s199 = scalar_select %p198, %s20, 2
          %s200 = scalar_lea.vmem %s2, %s199
        $region28: #{multi_head_attention.3} parent=19 // pred_fallthru
          _
      $region20: #{multi_head_attention.3} parent=5 // pred_fallthru
        _
      %p201 = scmp.le.s32.totalorder 1, %s12
      %p202 = scmp.lt.s32.totalorder %s12, 4
      %p203 = pnand %p201, %p202
      %p204 = pneg %p203
      // Predicated region
      $region29: #{multi_head_attention.3} parent=5 // pred_check
        _
      $region30: #{multi_head_attention.3} parent=5 // pred_check_branch
        %206 = sbr.rel (%p203) target = $region32
      $region31: #{multi_head_attention.3} parent=5 // pred_region
        %s207 = ssub.s32 %s12, 1
        %s208 = sand.u32 %s74, 1
        %s209 = scalar_lea.sflag [#allocation4], %s208
        %s210 = sand.u32 %s74, 1
        %s211 = smul.addr %s210, 128
        %s212 = scalar_lea.vmem [#allocation3], %s211
        // Predicated region
        $region33: #{multi_head_attention.3} parent=31 // pred_check
          %p213 = pneg %p87
        $region34: #{multi_head_attention.3} parent=31 // pred_check_branch
          %215 = sbr.rel (%p213) target = $region36
        $region35: #{multi_head_attention.3} parent=31 // pred_region
          %216 = dma.done %s209, 2048
        $region36: #{multi_head_attention.3} parent=31 // pred_fallthru
          _
        %s217 = smul.u32 2, %s22
        %p218 = scmp.lt.s32.totalorder %s217, 1
        %s219 = scalar_select %p218, %s217, 1
        %p220 = scmp.lt.s32.totalorder %s24, 0
        %s221 = scalar_select %p220, %s24, 0
        %s222 = sadd.s32 %s221, %s219
        %s223 = smul.addr %s222, 8
        %s224 = scalar_lea.vmem %s0, %s223
        %p225 = pneg %p59
        %p226 = pneg %p56
        %s227 = sand.u32 %s74, 1
        %s228 = scalar_lea.sflag [#allocation4], %s227
        %s229 = sand.u32 %s74, 1
        %s230 = smul.addr %s229, 128
        %s231 = scalar_lea.vmem [#allocation3], %s230
        %p232 = pneg %p87
        %p233 = pneg %p84
        %p234 = scmp.lt.s32.totalorder %s23, 2
        %s235 = scalar_select %p234, %s23, 2
        %s236 = scalar_lea.vmem %s2, %s235
        %p237 = pneg %p113
        %p238 = pneg %p110
        %p239 = pneg %p141
        %p240 = pneg %p138
        %s241 = sand.u32 %s128, 1
        %s242 = sand.u32 %s128, 1
        %s243 = smul.addr %s242, 16
        %s244 = scalar_lea.vmem [#allocation5], %s243
        %s245 = smul.u32 2, %s22
        %p246 = scmp.lt.s32.totalorder %s245, 1
        %s247 = scalar_select %p246, %s245, 1
        %p248 = scmp.lt.s32.totalorder %s24, 0
        %s249 = scalar_select %p248, %s24, 0
        %s250 = sadd.s32 %s249, %s247
        %s251 = smul.addr %s250, 8
        %s252 = scalar_lea.vmem %s0, %s251
        %s253 = smul.u32 2, %s22
        %s254 = smul.u32 16, %s24
        %p255 = scmp.lt.s32.totalorder %s23, 2
        %s256 = scalar_select %p255, %s23, 2
        %s257 = scalar_lea.vmem %s2, %s256
        %s258 = smul.u32 2, %s22
        %p259 = scmp.eq.s32.totalorder %s24, 0
        // Predicated region
        $region37: #{multi_head_attention.3} parent=31 // pred_check
          %p260 = pneg %p259
        $region38: #{multi_head_attention.3} parent=31 // pred_check_branch
          %262 = sbr.rel (%p260) target = $region40
        $region39: #{multi_head_attention.3} parent=31 // pred_region
          %263 = vst [vmem:[#allocation2] sm:$0xff] 0.0
          %264 = vst [vmem:[#allocation2 + $0x8] sm:$0xff] 0.0
        $region40: #{multi_head_attention.3} parent=31 // pred_fallthru
          _
        %v265 = vld [vmem:[#allocation2] sm:$0xff]
        %v266 = vld [vmem:[#allocation2 + $0x8] sm:$0xff]
        %v267 = vld [vmem:[%s252] sm:$0xff]
        %v268 = vld [vmem:[%s252 + $0x8] sm:$0xff]
        %v269 = vld [vmem:[%s212] sm:$0xff]
        %v270 = vld [vmem:[%s212 + $0x8] sm:$0xff]
        %v271 = vld [vmem:[%s212 + $0x10] sm:$0xff]
        %v272 = vld [vmem:[%s212 + $0x18] sm:$0xff]
        %v273 = vld [vmem:[%s212 + $0x20] sm:$0xff]
        %v274 = vld [vmem:[%s212 + $0x28] sm:$0xff]
        %v275 = vld [vmem:[%s212 + $0x30] sm:$0xff]
        %v276 = vld [vmem:[%s212 + $0x38] sm:$0xff]
        %v277 = vld [vmem:[%s212 + $0x40] sm:$0xff]
        %v278 = vld [vmem:[%s212 + $0x48] sm:$0xff]
        %v279 = vld [vmem:[%s212 + $0x50] sm:$0xff]
        %v280 = vld [vmem:[%s212 + $0x58] sm:$0xff]
        %v281 = vld [vmem:[%s212 + $0x60] sm:$0xff]
        %v282 = vld [vmem:[%s212 + $0x68] sm:$0xff]
        %v283 = vld [vmem:[%s212 + $0x70] sm:$0xff]
        %v284 = vld [vmem:[%s212 + $0x78] sm:$0xff]
        %285 = vmatprep.subr.mxu0 0.0
        %286 = vmatpush1.msra.mxu0 %v269
        %287 = vmatprep.subr.mxu0 0.0
        %288 = vmatpush1.msra.mxu0 %v270
        %289 = vmatprep.subr.mxu0 0.0
        %290 = vmatpush1.msra.mxu0 %v271
        %291 = vmatprep.subr.mxu0 0.0
        %292 = vmatpush1.msra.mxu0 %v272
        %293 = vmatprep.subr.mxu0 0.0
        %294 = vmatpush1.msra.mxu0 %v273
        %295 = vmatprep.subr.mxu0 0.0
        %296 = vmatpush1.msra.mxu0 %v274
        %297 = vmatprep.subr.mxu0 0.0
        %298 = vmatpush1.msra.mxu0 %v275
        %299 = vmatprep.subr.mxu0 0.0
        %300 = vmatpush1.msra.mxu0 %v276
        %301 = vmatprep.subr.mxu0 0.0
        %302 = vmatpush1.msra.mxu0 %v277
        %303 = vmatprep.subr.mxu0 0.0
        %304 = vmatpush1.msra.mxu0 %v278
        %305 = vmatprep.subr.mxu0 0.0
        %306 = vmatpush1.msra.mxu0 %v279
        %307 = vmatprep.subr.mxu0 0.0
        %308 = vmatpush1.msra.mxu0 %v280
        %309 = vmatprep.subr.mxu0 0.0
        %310 = vmatpush1.msra.mxu0 %v281
        %311 = vmatprep.subr.mxu0 0.0
        %312 = vmatpush1.msra.mxu0 %v282
        %313 = vmatprep.subr.mxu0 0.0
        %314 = vmatpush1.msra.mxu0 %v283
        %315 = vmatprep.subr.mxu0 0.0
        %316 = vmatpush1.msra.mxu0 %v284
        %317 = vmatprep.subr.mxu0 0.0
        %318 = vmatpush1.msra.mxu0 0.0
        %319 = vmatprep.subr.mxu0 0.0
        %320 = vmatpush1.msra.mxu0 0.0
        %321 = vmatprep.subr.mxu0 0.0
        %322 = vmatpush1.msra.mxu0 0.0
        %323 = vmatprep.subr.mxu0 0.0
        %324 = vmatpush1.msra.mxu0 0.0
        %325 = vmatprep.subr.mxu0 0.0
        %326 = vmatpush1.msra.mxu0 0.0
        %327 = vmatprep.subr.mxu0 0.0
        %328 = vmatpush1.msra.mxu0 0.0
        %329 = vmatprep.subr.mxu0 0.0
        %330 = vmatpush1.msra.mxu0 0.0
        %331 = vmatprep.subr.mxu0 0.0
        %332 = vmatpush1.msra.mxu0 0.0
        %333 = vmatprep.subr.mxu0 0.0
        %334 = vmatpush1.msra.mxu0 0.0
        %335 = vmatprep.subr.mxu0 0.0
        %336 = vmatpush1.msra.mxu0 0.0
        %337 = vmatprep.subr.mxu0 0.0
        %338 = vmatpush1.msra.mxu0 0.0
        %339 = vmatprep.subr.mxu0 0.0
        %340 = vmatpush1.msra.mxu0 0.0
        %341 = vmatprep.subr.mxu0 0.0
        %342 = vmatpush1.msra.mxu0 0.0
        %343 = vmatprep.subr.mxu0 0.0
        %344 = vmatpush1.msra.mxu0 0.0
        %345 = vmatprep.subr.mxu0 0.0
        %346 = vmatpush1.msra.mxu0 0.0
        %347 = vmatprep.subr.mxu0 0.0
        %348 = vmatpush1.msra.mxu0 0.0
        %349 = vmatprep.mubr.f32.mxu0 0.0
        %350 = vmatmul.mubr.f32.gmra.mrb[0].mxu0 %v267
        %v351 = vpop.f32.mrb[0].mxu0
        %v352 = vadd.f32 0.0, %v351
        %v353 = vpop.f32.mrb[0].mxu0
        %354 = vmatprep.mubr.f32.mxu0 0.0
        %355 = vmatmul.mubr.f32.gmra.mrb[0].mxu0 %v268
        %v356 = vpop.f32.mrb[0].mxu0
        %v357 = vadd.f32 0.0, %v356
        %v358 = vpop.f32.mrb[0].mxu0
        %359 = vdwg.mxu0
        %v360 = vadd.f32 %v265, %v352
        %v361 = vadd.f32 %v266, %v357
        %362 = vst [vmem:[#allocation2] sm:$0xff] %v360
        %363 = vst [vmem:[#allocation2 + $0x8] sm:$0xff] %v361
        // Predicated region
        $region41: #{multi_head_attention.3} parent=31 // pred_check
          %p364 = pneg %p259
        $region42: #{multi_head_attention.3} parent=31 // pred_check_branch
          %366 = sbr.rel (%p364) target = $region44
        $region43: #{multi_head_attention.3} parent=31 // pred_region
          %v367 = vld [vmem:[#allocation2] sm:$0xff]
          %v368 = vld [vmem:[#allocation2 + $0x8] sm:$0xff]
          %v369 = vld [vmem:[%s257] sm:$0x1]
          %v371 = vlaneseq
          %v372 = vshrl.u32 %v371, 7
          %v373 = vsub.s32 0, %v372
          %v374 = vrot.slane %v369, %v373
          %v376 = vadd.f32 %v367, %v374
          %v377 = vadd.f32 %v368, %v374
          %378 = vst [vmem:[%s244] sm:$0xff] %v376
          %379 = vst [vmem:[%s244 + $0x8] sm:$0xff] %v377
        $region44: #{multi_head_attention.3} parent=31 // pred_fallthru
          _
        %s380 = sand.u32 %s128, 1
        %s381 = sand.u32 %s128, 1
        %s382 = smul.addr %s381, 16
        %s383 = scalar_lea.vmem [#allocation5], %s382
        // Predicated region
        $region45: #{multi_head_attention.3} parent=31 // pred_check
          %p384 = pneg %p138
        $region46: #{multi_head_attention.3} parent=31 // pred_check_branch
          %386 = sbr.rel (%p384) target = $region48
        $region47: #{multi_head_attention.3} parent=31 // pred_region
          %s387 = smul.u32 2, %s22
          %s388 = smul.addr %s387, 3
          %s389 = sadd.s32 %s23, %s388
          %s390 = smul.addr %s389, 8
          %s391 = scalar_lea.vmem %s3, %s390
          // Predicated region
          $region49: #{multi_head_attention.3} parent=47 // pred_check
            _
          $region50: #{multi_head_attention.3} parent=47 // pred_check_branch
            %393 = sbr.rel (0) target = $region52
          $region51: #{multi_head_attention.3} parent=47 // pred_region
            // Predicated region
            $region53: #{multi_head_attention.3} parent=51 // pred_check
              _
            $region54: #{multi_head_attention.3} parent=51 // pred_check_branch
              %395 = sbr.rel (0) target = $region56
            $region55: #{multi_head_attention.3} parent=51 // pred_region
              // Predicated region
              $region68: #{multi_head_attention.3} parent=55 // pred_check
                _
              $region69: #{multi_head_attention.3} parent=55 // pred_check_branch
                %412 = sbr.rel (0) target = $region71
              $region70: #{multi_head_attention.3} parent=55 // pred_region
                loop: start=0, step=1, limit=1
                $region72: #{multi_head_attention.3} parent=70 // loop_pre_header
                  _
                $region73: #{multi_head_attention.3} parent=70 // loop_header
                  %s414 = sphi 0, %s418
                  %p415 = scmp.ge.s32.totalorder %s414, 1
                  %s419 = sphi %s383, %s383
                  %s420 = sphi %s391, %s391
                $region74: #{multi_head_attention.3} parent=70 // loop_header_branch
                  %417 = sbr.rel (%p415) target = $region78
                $region75: #{multi_head_attention.3} parent=70 // loop_body
                  %v421 = vld [vmem:[%s419] sm:$0xff]
                  %422 = vst [vmem:[%s420] sm:$0xff] %v421
                  %v423 = vld [vmem:[%s419 + $0x8] sm:$0xff]
                  %424 = vst [vmem:[%s420 + $0x18] sm:$0xff] %v423
                $region76: #{multi_head_attention.3} parent=70 // loop_footer
                  %s418 = sadd.s32 1, %s414
                $region77: #{multi_head_attention.3} parent=70 // loop_footer_branch
                  %413 = sbr.rel target = $region73
                $region78: #{multi_head_attention.3} parent=70 // loop_exit
                  _
              $region71: #{multi_head_attention.3} parent=55 // pred_fallthru
                _
              // Predicated region
              $region79: #{multi_head_attention.3} parent=55 // pred_check
                _
              $region80: #{multi_head_attention.3} parent=55 // pred_check_branch
                %426 = sbr.rel target = $region82
              $region81: #{multi_head_attention.3} parent=55 // pred_region
                _
              $region82: #{multi_head_attention.3} parent=55 // pred_fallthru
                _
            $region56: #{multi_head_attention.3} parent=51 // pred_fallthru
              _
            // Predicated region
            $region57: #{multi_head_attention.3} parent=51 // pred_check
              _
            $region58: #{multi_head_attention.3} parent=51 // pred_check_branch
              %397 = sbr.rel target = $region60
            $region59: #{multi_head_attention.3} parent=51 // pred_region
              loop: start=0, step=1, limit=1
              $region61: #{multi_head_attention.3} parent=59 // loop_pre_header
                _
              $region62: #{multi_head_attention.3} parent=59 // loop_header
                %s400 = sphi 0, %s404
                %p401 = scmp.ge.s32.totalorder %s400, 1
                %s405 = sphi %s383, %s383
                %s406 = sphi %s391, %s391
              $region63: #{multi_head_attention.3} parent=59 // loop_header_branch
                %403 = sbr.rel (%p401) target = $region67
              $region64: #{multi_head_attention.3} parent=59 // loop_body
                %v407 = vld [vmem:[%s405] sm:$0xff]
                %408 = vst [vmem:[%s406] sm:$0xff] %v407
                %v409 = vld [vmem:[%s405 + $0x8] sm:$0xff]
                %410 = vst [vmem:[%s406 + $0x18] sm:$0xff] %v409
              $region65: #{multi_head_attention.3} parent=59 // loop_footer
                %s404 = sadd.s32 1, %s400
              $region66: #{multi_head_attention.3} parent=59 // loop_footer_branch
                %399 = sbr.rel target = $region62
              $region67: #{multi_head_attention.3} parent=59 // loop_exit
                _
            $region60: #{multi_head_attention.3} parent=51 // pred_fallthru
              _
          $region52: #{multi_head_attention.3} parent=47 // pred_fallthru
            _
          %427 = vnop
        $region48: #{multi_head_attention.3} parent=31 // pred_fallthru
          _
      $region32: #{multi_head_attention.3} parent=5 // pred_fallthru
        _
      %p428 = scmp.le.s32.totalorder 2, %s12
      // Predicated region
      $region83: #{multi_head_attention.3} parent=5 // pred_check
        %p429 = pneg %p428
      $region84: #{multi_head_attention.3} parent=5 // pred_check_branch
        %431 = sbr.rel (%p429) target = $region86
      $region85: #{multi_head_attention.3} parent=5 // pred_region
        %s432 = ssub.s32 %s12, 2
        // Predicated region
        $region87: #{multi_head_attention.3} parent=85 // pred_check
          %p433 = pneg %p144
        $region88: #{multi_head_attention.3} parent=85 // pred_check_branch
          %435 = sbr.rel (%p433) target = $region90
        $region89: #{multi_head_attention.3} parent=85 // pred_region
          %s436 = sand.u32 %s129, 1
          %s437 = sand.u32 %s129, 1
          %s438 = smul.addr %s437, 16
          %s439 = scalar_lea.vmem [#allocation5], %s438
        $region90: #{multi_head_attention.3} parent=85 // pred_fallthru
          _
      $region86: #{multi_head_attention.3} parent=5 // pred_fallthru
        _
    $region6: #{multi_head_attention.3} parent=1 // loop_footer
      %s16 = sadd.s32 1, %s12
    $region7: #{multi_head_attention.3} parent=1 // loop_footer_branch
      %11 = sbr.rel target = $region3
    $region8: #{multi_head_attention.3} parent=1 // loop_exit
      _
    %440 = vsyncpa [#allocation4], 1
    %s441 = scalar_lea.sflag [#allocation4], 1
    %442 = vsyncpa %s441, 1

// kernel: multi_head_attention.5
$region0: #{multi_head_attention.5}
  #allocation0 [shape = 'u32[]', space=smem, size = 0x4, offset = 0x4, fixed_abs, tag = 'smem constant byte address 0x4 - core index']
  #allocation1 [shape = 'u32[144,128]{1,0:T(1,128)}', space=vmem, size = 0x12000, scoped, tag = 'internal scratch']
  #allocation2 [shape = 'f32[16,128]{1,0:T(8,128)}', space=vmem, size = 0x2000, scoped, tag = 'scratch operand']
  %s0 = inlined_call_operand.vmem [shape: f32[16,128], index: 0, kind: input, shape index: {}]
  %s1 = inlined_call_operand.vmem [shape: f32[128,128], index: 1, kind: input, shape index: {}]
  %s2 = inlined_call_operand.vmem [shape: f32[1,128], index: 2, kind: input, shape index: {}]
  %s3 = inlined_call_operand.hbm [shape: f32[16,128], index: 3, kind: output, shape index: {}]
  %s4 = sld [smem:[#allocation0]]
  $region30: #{multi_head_attention.5} parent=0
    _
  %s6 = ssub.s32 1, %s4
  %s7 = scalar_select 0, %s6, %s4
  $region1: #{multi_head_attention.5} parent=0
    #allocation3 [shape = 'u8[8192]{0}', space=vmem, size = 0x2000, scoped, tag = 'output window, operand 0, single buffered']
    #allocation4 [shape = 's32[1]{0}', space=sflag, size = 0x4, scoped, tag = 'scoped memory for multi_head_attention.5']
    %8 = vsyncpa [#allocation4], 0
    // Predicated region
    $region2: #{multi_head_attention.5} parent=1 // pred_check
      _
    $region3: #{multi_head_attention.5} parent=1 // pred_check_branch
      %10 = sbr.rel (0) target = $region5
    $region4: #{multi_head_attention.5} parent=1 // pred_region
      _
    $region5: #{multi_head_attention.5} parent=1 // pred_fallthru
      _
    // Predicated region
    $region6: #{multi_head_attention.5} parent=1 // pred_check
      _
    $region7: #{multi_head_attention.5} parent=1 // pred_check_branch
      %12 = sbr.rel (0) target = $region9
    $region8: #{multi_head_attention.5} parent=1 // pred_region
      _
    $region9: #{multi_head_attention.5} parent=1 // pred_fallthru
      _
    // Predicated region
    $region10: #{multi_head_attention.5} parent=1 // pred_check
      _
    $region11: #{multi_head_attention.5} parent=1 // pred_check_branch
      %14 = sbr.rel (0) target = $region13
    $region12: #{multi_head_attention.5} parent=1 // pred_region
      _
    $region13: #{multi_head_attention.5} parent=1 // pred_fallthru
      _
    %p15 = scmp.eq.s32.totalorder 0, 0
    // Predicated region
    $region14: #{multi_head_attention.5} parent=1 // pred_check
      %p16 = pneg %p15
    $region15: #{multi_head_attention.5} parent=1 // pred_check_branch
      %18 = sbr.rel (%p16) target = $region17
    $region16: #{multi_head_attention.5} parent=1 // pred_region
      %19 = vst [vmem:[#allocation2] sm:$0xff] 0.0
      %20 = vst [vmem:[#allocation2 + $0x8] sm:$0xff] 0.0
    $region17: #{multi_head_attention.5} parent=1 // pred_fallthru
      _
    %v21 = vld [vmem:[#allocation2] sm:$0xff]
    %v22 = vld [vmem:[#allocation2 + $0x8] sm:$0xff]
    %v23 = vld [vmem:[%s0] sm:$0xff]
    %v24 = vld [vmem:[%s0 + $0x8] sm:$0xff]
    %v25 = vld [vmem:[%s1] sm:$0xff]
    %v26 = vld [vmem:[%s1 + $0x8] sm:$0xff]
    %v27 = vld [vmem:[%s1 + $0x10] sm:$0xff]
    %v28 = vld [vmem:[%s1 + $0x18] sm:$0xff]
    %v29 = vld [vmem:[%s1 + $0x20] sm:$0xff]
    %v30 = vld [vmem:[%s1 + $0x28] sm:$0xff]
    %v31 = vld [vmem:[%s1 + $0x30] sm:$0xff]
    %v32 = vld [vmem:[%s1 + $0x38] sm:$0xff]
    %v33 = vld [vmem:[%s1 + $0x40] sm:$0xff]
    %v34 = vld [vmem:[%s1 + $0x48] sm:$0xff]
    %v35 = vld [vmem:[%s1 + $0x50] sm:$0xff]
    %v36 = vld [vmem:[%s1 + $0x58] sm:$0xff]
    %v37 = vld [vmem:[%s1 + $0x60] sm:$0xff]
    %v38 = vld [vmem:[%s1 + $0x68] sm:$0xff]
    %v39 = vld [vmem:[%s1 + $0x70] sm:$0xff]
    %v40 = vld [vmem:[%s1 + $0x78] sm:$0xff]
    %41 = vmatprep.subr.mxu0 0.0
    %42 = vmatpush1.msra.mxu0 %v25
    %43 = vmatprep.subr.mxu0 0.0
    %44 = vmatpush1.msra.mxu0 %v26
    %45 = vmatprep.subr.mxu0 0.0
    %46 = vmatpush1.msra.mxu0 %v27
    %47 = vmatprep.subr.mxu0 0.0
    %48 = vmatpush1.msra.mxu0 %v28
    %49 = vmatprep.subr.mxu0 0.0
    %50 = vmatpush1.msra.mxu0 %v29
    %51 = vmatprep.subr.mxu0 0.0
    %52 = vmatpush1.msra.mxu0 %v30
    %53 = vmatprep.subr.mxu0 0.0
    %54 = vmatpush1.msra.mxu0 %v31
    %55 = vmatprep.subr.mxu0 0.0
    %56 = vmatpush1.msra.mxu0 %v32
    %57 = vmatprep.subr.mxu0 0.0
    %58 = vmatpush1.msra.mxu0 %v33
    %59 = vmatprep.subr.mxu0 0.0
    %60 = vmatpush1.msra.mxu0 %v34
    %61 = vmatprep.subr.mxu0 0.0
    %62 = vmatpush1.msra.mxu0 %v35
    %63 = vmatprep.subr.mxu0 0.0
    %64 = vmatpush1.msra.mxu0 %v36
    %65 = vmatprep.subr.mxu0 0.0
    %66 = vmatpush1.msra.mxu0 %v37
    %67 = vmatprep.subr.mxu0 0.0
    %68 = vmatpush1.msra.mxu0 %v38
    %69 = vmatprep.subr.mxu0 0.0
    %70 = vmatpush1.msra.mxu0 %v39
    %71 = vmatprep.subr.mxu0 0.0
    %72 = vmatpush1.msra.mxu0 %v40
    %73 = vmatprep.subr.mxu0 0.0
    %74 = vmatpush1.msra.mxu0 0.0
    %75 = vmatprep.subr.mxu0 0.0
    %76 = vmatpush1.msra.mxu0 0.0
    %77 = vmatprep.subr.mxu0 0.0
    %78 = vmatpush1.msra.mxu0 0.0
    %79 = vmatprep.subr.mxu0 0.0
    %80 = vmatpush1.msra.mxu0 0.0
    %81 = vmatprep.subr.mxu0 0.0
    %82 = vmatpush1.msra.mxu0 0.0
    %83 = vmatprep.subr.mxu0 0.0
    %84 = vmatpush1.msra.mxu0 0.0
    %85 = vmatprep.subr.mxu0 0.0
    %86 = vmatpush1.msra.mxu0 0.0
    %87 = vmatprep.subr.mxu0 0.0
    %88 = vmatpush1.msra.mxu0 0.0
    %89 = vmatprep.subr.mxu0 0.0
    %90 = vmatpush1.msra.mxu0 0.0
    %91 = vmatprep.subr.mxu0 0.0
    %92 = vmatpush1.msra.mxu0 0.0
    %93 = vmatprep.subr.mxu0 0.0
    %94 = vmatpush1.msra.mxu0 0.0
    %95 = vmatprep.subr.mxu0 0.0
    %96 = vmatpush1.msra.mxu0 0.0
    %97 = vmatprep.subr.mxu0 0.0
    %98 = vmatpush1.msra.mxu0 0.0
    %99 = vmatprep.subr.mxu0 0.0
    %100 = vmatpush1.msra.mxu0 0.0
    %101 = vmatprep.subr.mxu0 0.0
    %102 = vmatpush1.msra.mxu0 0.0
    %103 = vmatprep.subr.mxu0 0.0
    %104 = vmatpush1.msra.mxu0 0.0
    %105 = vmatprep.mubr.f32.mxu0 0.0
    %106 = vmatmul.mubr.f32.gmra.mrb[0].mxu0 %v23
    %v107 = vpop.f32.mrb[0].mxu0
    %v108 = vadd.f32 0.0, %v107
    %v109 = vpop.f32.mrb[0].mxu0
    %110 = vmatprep.mubr.f32.mxu0 0.0
    %111 = vmatmul.mubr.f32.gmra.mrb[0].mxu0 %v24
    %v112 = vpop.f32.mrb[0].mxu0
    %v113 = vadd.f32 0.0, %v112
    %v114 = vpop.f32.mrb[0].mxu0
    %115 = vdwg.mxu0
    %v116 = vadd.f32 %v21, %v108
    %v117 = vadd.f32 %v22, %v113
    %118 = vst [vmem:[#allocation2] sm:$0xff] %v116
    %119 = vst [vmem:[#allocation2 + $0x8] sm:$0xff] %v117
    // Predicated region
    $region18: #{multi_head_attention.5} parent=1 // pred_check
      %p120 = pneg %p15
    $region19: #{multi_head_attention.5} parent=1 // pred_check_branch
      %122 = sbr.rel (%p120) target = $region21
    $region20: #{multi_head_attention.5} parent=1 // pred_region
      %v123 = vld [vmem:[#allocation2] sm:$0xff]
      %v124 = vld [vmem:[#allocation2 + $0x8] sm:$0xff]
      %v125 = vld [vmem:[%s2] sm:$0x1]
      %v127 = vlaneseq
      %v128 = vshrl.u32 %v127, 7
      %v129 = vsub.s32 0, %v128
      %v130 = vrot.slane %v125, %v129
      %v132 = vadd.f32 %v123, %v130
      %v133 = vadd.f32 %v124, %v130
      %134 = vst [vmem:[#allocation3] sm:$0xff] %v132
      %135 = vst [vmem:[#allocation3 + $0x8] sm:$0xff] %v133
    $region21: #{multi_head_attention.5} parent=1 // pred_fallthru
      _
    // Predicated region
    $region22: #{multi_head_attention.5} parent=1 // pred_check
      _
    $region23: #{multi_head_attention.5} parent=1 // pred_check_branch
      %137 = sbr.rel (0) target = $region25
    $region24: #{multi_head_attention.5} parent=1 // pred_region
      %s139 = ssub.s32 256, 256
      %140 = vsyncadd [#allocation4], %s139
      %s141 = sshll.u32 [#allocation3], 4
      %s142 = int_to_ptr.vmem [resolvable:$true] %s141
      %147 = dma.vmem_to_hbm [thread:$0]  %s142, 256, %s3, [#allocation4], 128, 128, 8
    $region25: #{multi_head_attention.5} parent=1 // pred_fallthru
      _
    // Predicated region
    $region26: #{multi_head_attention.5} parent=1 // pred_check
      _
    $region27: #{multi_head_attention.5} parent=1 // pred_check_branch
      %149 = sbr.rel (0) target = $region29
    $region28: #{multi_head_attention.5} parent=1 // pred_region
      %150 = dma.done [#allocation4], 256
    $region29: #{multi_head_attention.5} parent=1 // pred_fallthru
      _
    %151 = vsyncpa [#allocation4], 1

// kernel: multi_head_attention.4
$region0: #{multi_head_attention.4}
  #allocation0 [shape = 'u32[]', space=smem, size = 0x4, offset = 0x4, fixed_abs, tag = 'smem constant byte address 0x4 - core index']
  #allocation1 [shape = 'u32[144,128]{1,0:T(1,128)}', space=vmem, size = 0x12000, scoped, tag = 'internal scratch']
  #allocation2 [shape = 'f32[8,4]{1,0:T(8,128)}', space=vmem, size = 0x1000, scoped, tag = 'scratch operand']
  #allocation3 [shape = 'f32[8,4]{1,0:T(8,128)}', space=vmem, size = 0x1000, scoped, tag = 'scratch operand']
  #allocation4 [shape = 'f32[8,128]{1,0:T(8,128)}', space=vmem, size = 0x1000, scoped, tag = 'scratch operand']
  %s0 = inlined_call_operand.vmem [shape: f32[2,8,384], index: 0, kind: input, shape index: {}, may-alias: {0,1,2}]
  %s1 = inlined_call_operand.vmem [shape: f32[2,8,384], index: 1, kind: input, shape index: {}, may-alias: {0,1,2}]
  %s2 = inlined_call_operand.vmem [shape: f32[2,8,384], index: 2, kind: input, shape index: {}, may-alias: {0,1,2}]
  %s3 = inlined_call_operand.vmem [shape: f32[2,8,128], index: 3, kind: output, shape index: {}]
  %s4 = sld [smem:[#allocation0]]
  $region53: #{multi_head_attention.4} parent=0
    _
  %s6 = ssub.s32 1, %s4
  %s7 = scalar_select 0, %s6, %s4
  loop: start=0, step=1, limit=4
  $region2: #{multi_head_attention.4} parent=0 // loop_pre_header
    _
  $region3: #{multi_head_attention.4} parent=0 // loop_header
    %s9 = sphi 0, %s13
    %p10 = scmp.ge.s32.totalorder %s9, 4
    %s16 = sphi 0, %s35
    %s17 = sphi 0, %s31
    %s18 = sphi 0, %s27
    %s19 = sphi 0, %s16
    %s20 = sphi 0, %s17
    %s21 = sphi 0, %s18
    %s22 = sphi 0, %s19
    %s23 = sphi 0, %s20
    %s24 = sphi 0, %s21
    %s40 = sphi 0, %s42
    %s43 = sphi 0, %s40
    %s44 = sphi 0, %s43
    %s60 = sphi 0, %s44
    %s68 = sphi 0, %s70
    %s71 = sphi 0, %s68
    %s72 = sphi 0, %s71
    %s88 = sphi 0, %s72
    %s96 = sphi 0, %s98
    %s99 = sphi 0, %s96
    %s100 = sphi 0, %s99
    %s116 = sphi 0, %s100
    %s124 = sphi 0, %s126
    %s127 = sphi 0, %s124
    %s128 = sphi 0, %s127
    %s144 = sphi 0, %s128
  $region4: #{multi_head_attention.4} parent=0 // loop_header_branch
    %12 = sbr.rel (%p10) target = $region8
  $region5: #{multi_head_attention.4} parent=0 // loop_body
    %s14 = ssub.s32 %s9, 1
    %s15 = ssub.s32 %s9, 2
    %s25 = sadd.s32 1, %s18
    %p26 = scmp.ge.s32.totalorder %s25, 1
    %s27 = scalar_select %p26, 0, %s25
    %s28 = sadd.s32 1, %s17
    %s29 = scalar_select %p26, %s28, %s17
    %p30 = scmp.ge.s32.totalorder %s29, 1
    %s31 = scalar_select %p30, 0, %s29
    %s32 = sadd.s32 1, %s16
    %s33 = scalar_select %p30, %s32, %s16
    %p34 = scmp.ge.s32.totalorder %s33, 2
    %s35 = scalar_select %p34, 0, %s33
    %s36 = ssub.s32 %s16, %s35
    %s37 = ssub.s32 %s17, %s31
    %s38 = sor.u32 %s36, %s37
    %p39 = scmp.eq.s32.totalorder %s38, 0
    %s41 = sadd.s32 %s40, 1
    %s42 = scalar_select %p39, %s40, %s41
    %p45 = pneg %p39
    %p46 = scmp.eq.s32.totalorder %s9, 1
    %p47 = por %p45, %p46
    %p48 = scmp.ne.s32.totalorder %s40, %s43
    %p49 = scmp.eq.s32.totalorder %s9, 0
    %p50 = por %p48, %p49
    %p51 = scmp.ne.s32.totalorder %s40, %s43
    %p52 = scmp.eq.s32.totalorder %s14, 1
    %p53 = por %p51, %p52
    %p54 = scmp.ne.s32.totalorder %s43, %s44
    %p55 = scmp.eq.s32.totalorder %s14, 0
    %p56 = por %p54, %p55
    %p57 = scmp.ne.s32.totalorder %s43, %s44
    %p58 = scmp.eq.s32.totalorder %s15, 1
    %p59 = por %p57, %p58
    %p61 = scmp.ne.s32.totalorder %s44, %s60
    %p62 = scmp.eq.s32.totalorder %s15, 0
    %p63 = por %p61, %p62
    %s64 = ssub.s32 %s16, %s35
    %s65 = ssub.s32 %s18, %s27
    %s66 = sor.u32 %s64, %s65
    %p67 = scmp.eq.s32.totalorder %s66, 0
    %s69 = sadd.s32 %s68, 1
    %s70 = scalar_select %p67, %s68, %s69
    %p73 = pneg %p67
    %p74 = scmp.eq.s32.totalorder %s9, 1
    %p75 = por %p73, %p74
    %p76 = scmp.ne.s32.totalorder %s68, %s71
    %p77 = scmp.eq.s32.totalorder %s9, 0
    %p78 = por %p76, %p77
    %p79 = scmp.ne.s32.totalorder %s68, %s71
    %p80 = scmp.eq.s32.totalorder %s14, 1
    %p81 = por %p79, %p80
    %p82 = scmp.ne.s32.totalorder %s71, %s72
    %p83 = scmp.eq.s32.totalorder %s14, 0
    %p84 = por %p82, %p83
    %p85 = scmp.ne.s32.totalorder %s71, %s72
    %p86 = scmp.eq.s32.totalorder %s15, 1
    %p87 = por %p85, %p86
    %p89 = scmp.ne.s32.totalorder %s72, %s88
    %p90 = scmp.eq.s32.totalorder %s15, 0
    %p91 = por %p89, %p90
    %s92 = ssub.s32 %s16, %s35
    %s93 = ssub.s32 %s18, %s27
    %s94 = sor.u32 %s92, %s93
    %p95 = scmp.eq.s32.totalorder %s94, 0
    %s97 = sadd.s32 %s96, 1
    %s98 = scalar_select %p95, %s96, %s97
    %p101 = pneg %p95
    %p102 = scmp.eq.s32.totalorder %s9, 1
    %p103 = por %p101, %p102
    %p104 = scmp.ne.s32.totalorder %s96, %s99
    %p105 = scmp.eq.s32.totalorder %s9, 0
    %p106 = por %p104, %p105
    %p107 = scmp.ne.s32.totalorder %s96, %s99
    %p108 = scmp.eq.s32.totalorder %s14, 1
    %p109 = por %p107, %p108
    %p110 = scmp.ne.s32.totalorder %s99, %s100
    %p111 = scmp.eq.s32.totalorder %s14, 0
    %p112 = por %p110, %p111
    %p113 = scmp.ne.s32.totalorder %s99, %s100
    %p114 = scmp.eq.s32.totalorder %s15, 1
    %p115 = por %p113, %p114
    %p117 = scmp.ne.s32.totalorder %s100, %s116
    %p118 = scmp.eq.s32.totalorder %s15, 0
    %p119 = por %p117, %p118
    %s120 = ssub.s32 %s16, %s35
    %s121 = ssub.s32 %s17, %s31
    %s122 = sor.u32 %s120, %s121
    %p123 = scmp.eq.s32.totalorder %s122, 0
    %s125 = sadd.s32 %s124, 1
    %s126 = scalar_select %p123, %s124, %s125
    %p129 = pneg %p123
    %p130 = scmp.eq.s32.totalorder %s9, 1
    %p131 = por %p129, %p130
    %p132 = scmp.ne.s32.totalorder %s124, %s127
    %p133 = scmp.eq.s32.totalorder %s9, 0
    %p134 = por %p132, %p133
    %p135 = scmp.ne.s32.totalorder %s124, %s127
    %p136 = scmp.eq.s32.totalorder %s14, 1
    %p137 = por %p135, %p136
    %p138 = scmp.ne.s32.totalorder %s127, %s128
    %p139 = scmp.eq.s32.totalorder %s14, 0
    %p140 = por %p138, %p139
    %p141 = scmp.ne.s32.totalorder %s127, %s128
    %p142 = scmp.eq.s32.totalorder %s15, 1
    %p143 = por %p141, %p142
    %p145 = scmp.ne.s32.totalorder %s128, %s144
    %p146 = scmp.eq.s32.totalorder %s15, 0
    %p147 = por %p145, %p146
    %p148 = scmp.le.s32.totalorder 1, %s9
    %p149 = scmp.lt.s32.totalorder %s9, 3
    %p150 = pnand %p148, %p149
    %p151 = pneg %p150
    // Predicated region
    $region9: #{multi_head_attention.4} parent=5 // pred_check
      _
    $region10: #{multi_head_attention.4} parent=5 // pred_check_branch
      %153 = sbr.rel (%p150) target = $region12
    $region11: #{multi_head_attention.4} parent=5 // pred_region
      %s154 = ssub.s32 %s9, 1
    $region12: #{multi_head_attention.4} parent=5 // pred_fallthru
      _
    %p155 = scmp.lt.s32.totalorder %s9, 2
    // Predicated region
    $region13: #{multi_head_attention.4} parent=5 // pred_check
      %p156 = pneg %p155
    $region14: #{multi_head_attention.4} parent=5 // pred_check_branch
      %158 = sbr.rel (%p156) target = $region16
    $region15: #{multi_head_attention.4} parent=5 // pred_region
      // Predicated region
      $region17: #{multi_head_attention.4} parent=15 // pred_check
        %p159 = pneg %p50
      $region18: #{multi_head_attention.4} parent=15 // pred_check_branch
        %161 = sbr.rel (%p159) target = $region20
      $region19: #{multi_head_attention.4} parent=15 // pred_region
        %p162 = scmp.lt.s32.totalorder %s16, 1
        %s163 = scalar_select %p162, %s16, 1
        %p164 = scmp.lt.s32.totalorder %s17, 0
        %s165 = scalar_select %p164, %s17, 0
        %s166 = smul.addr %s165, 3
        %s167 = smul.addr %s163, 3
        %s168 = sadd.s32 %s166, %s167
        %s169 = smul.addr %s168, 8
        %s170 = scalar_lea.vmem %s0, %s169
      $region20: #{multi_head_attention.4} parent=15 // pred_fallthru
        _
      // Predicated region
      $region21: #{multi_head_attention.4} parent=15 // pred_check
        %p171 = pneg %p78
      $region22: #{multi_head_attention.4} parent=15 // pred_check_branch
        %173 = sbr.rel (%p171) target = $region24
      $region23: #{multi_head_attention.4} parent=15 // pred_region
        %p174 = scmp.lt.s32.totalorder %s16, 1
        %s175 = scalar_select %p174, %s16, 1
        %p176 = scmp.lt.s32.totalorder %s18, 0
        %s177 = scalar_select %p176, %s18, 0
        %s178 = smul.addr %s177, 3
        %s179 = sadd.s32 1, %s178
        %s180 = smul.addr %s175, 3
        %s181 = sadd.s32 %s179, %s180
        %s182 = smul.addr %s181, 8
        %s183 = scalar_lea.vmem %s1, %s182
      $region24: #{multi_head_attention.4} parent=15 // pred_fallthru
        _
      // Predicated region
      $region25: #{multi_head_attention.4} parent=15 // pred_check
        %p184 = pneg %p106
      $region26: #{multi_head_attention.4} parent=15 // pred_check_branch
        %186 = sbr.rel (%p184) target = $region28
      $region27: #{multi_head_attention.4} parent=15 // pred_region
        %p187 = scmp.lt.s32.totalorder %s16, 1
        %s188 = scalar_select %p187, %s16, 1
        %p189 = scmp.lt.s32.totalorder %s18, 0
        %s190 = scalar_select %p189, %s18, 0
        %s191 = smul.addr %s190, 3
        %s192 = sadd.s32 2, %s191
        %s193 = smul.addr %s188, 3
        %s194 = sadd.s32 %s192, %s193
        %s195 = smul.addr %s194, 8
        %s196 = scalar_lea.vmem %s2, %s195
      $region28: #{multi_head_attention.4} parent=15 // pred_fallthru
        _
    $region16: #{multi_head_attention.4} parent=5 // pred_fallthru
      _
    %p197 = scmp.le.s32.totalorder 1, %s9
    %p198 = scmp.lt.s32.totalorder %s9, 3
    %p199 = pnand %p197, %p198
    %p200 = pneg %p199
    // Predicated region
    $region29: #{multi_head_attention.4} parent=5 // pred_check
      _
    $region30: #{multi_head_attention.4} parent=5 // pred_check_branch
      %202 = sbr.rel (%p199) target = $region32
    $region31: #{multi_head_attention.4} parent=5 // pred_region
      %s203 = ssub.s32 %s9, 1
      %p204 = scmp.lt.s32.totalorder %s19, 1
      %s205 = scalar_select %p204, %s19, 1
      %p206 = scmp.lt.s32.totalorder %s20, 0
      %s207 = scalar_select %p206, %s20, 0
      %s208 = smul.addr %s207, 3
      %s209 = smul.addr %s205, 3
      %s210 = sadd.s32 %s208, %s209
      %s211 = smul.addr %s210, 8
      %s212 = scalar_lea.vmem %s0, %s211
      %p213 = pneg %p56
      %p214 = pneg %p53
      %p215 = scmp.lt.s32.totalorder %s19, 1
      %s216 = scalar_select %p215, %s19, 1
      %p217 = scmp.lt.s32.totalorder %s21, 0
      %s218 = scalar_select %p217, %s21, 0
      %s219 = smul.addr %s218, 3
      %s220 = sadd.s32 1, %s219
      %s221 = smul.addr %s216, 3
      %s222 = sadd.s32 %s220, %s221
      %s223 = smul.addr %s222, 8
      %s224 = scalar_lea.vmem %s1, %s223
      %p225 = pneg %p84
      %p226 = pneg %p81
      %p227 = scmp.lt.s32.totalorder %s19, 1
      %s228 = scalar_select %p227, %s19, 1
      %p229 = scmp.lt.s32.totalorder %s21, 0
      %s230 = scalar_select %p229, %s21, 0
      %s231 = smul.addr %s230, 3
      %s232 = sadd.s32 2, %s231
      %s233 = smul.addr %s228, 3
      %s234 = sadd.s32 %s232, %s233
      %s235 = smul.addr %s234, 8
      %s236 = scalar_lea.vmem %s2, %s235
      %p237 = pneg %p112
      %p238 = pneg %p109
      %p239 = pneg %p140
      %p240 = pneg %p137
      %p241 = scmp.lt.s32.totalorder %s19, 1
      %s242 = scalar_select %p241, %s19, 1
      %p243 = scmp.lt.s32.totalorder %s20, 0
      %s244 = scalar_select %p243, %s20, 0
      %s245 = sadd.s32 %s244, %s242
      %s246 = smul.addr %s245, 8
      %s247 = scalar_lea.vmem %s3, %s246
      %p248 = scmp.lt.s32.totalorder %s19, 1
      %s249 = scalar_select %p248, %s19, 1
      %p250 = scmp.lt.s32.totalorder %s20, 0
      %s251 = scalar_select %p250, %s20, 0
      %s252 = smul.addr %s251, 3
      %s253 = smul.addr %s249, 3
      %s254 = sadd.s32 %s252, %s253
      %s255 = smul.addr %s254, 8
      %s256 = scalar_lea.vmem %s0, %s255
      %p257 = scmp.lt.s32.totalorder %s19, 1
      %s258 = scalar_select %p257, %s19, 1
      %p259 = scmp.lt.s32.totalorder %s21, 0
      %s260 = scalar_select %p259, %s21, 0
      %s261 = smul.addr %s260, 3
      %s262 = sadd.s32 1, %s261
      %s263 = smul.addr %s258, 3
      %s264 = sadd.s32 %s262, %s263
      %s265 = smul.addr %s264, 8
      %s266 = scalar_lea.vmem %s1, %s265
      %p267 = scmp.lt.s32.totalorder %s19, 1
      %s268 = scalar_select %p267, %s19, 1
      %p269 = scmp.lt.s32.totalorder %s21, 0
      %s270 = scalar_select %p269, %s21, 0
      %s271 = smul.addr %s270, 3
      %s272 = sadd.s32 2, %s271
      %s273 = smul.addr %s268, 3
      %s274 = sadd.s32 %s272, %s273
      %s275 = smul.addr %s274, 8
      %s276 = scalar_lea.vmem %s2, %s275
      %p277 = scmp.lt.s32.totalorder %s19, 1
      %s278 = scalar_select %p277, %s19, 1
      %p279 = scmp.lt.s32.totalorder %s20, 0
      %s280 = scalar_select %p279, %s20, 0
      %s281 = sadd.s32 %s280, %s278
      %s282 = smul.addr %s281, 8
      %s283 = scalar_lea.vmem %s3, %s282
      %p284 = scmp.eq.s32.totalorder %s21, 0
      // Predicated region
      $region33: #{multi_head_attention.4} parent=31 // pred_check
        %p285 = pneg %p284
      $region34: #{multi_head_attention.4} parent=31 // pred_check_branch
        %287 = sbr.rel (%p285) target = $region36
      $region35: #{multi_head_attention.4} parent=31 // pred_region
        %vm288 = vcmask 31744
        %289 = vst.msk [vmem:[#allocation2] sm:$0xff] %vm288, -inf
        %290 = vst.msk [vmem:[#allocation3] sm:$0xff] %vm288, 0.0
        %291 = vst [vmem:[#allocation4] sm:$0xff] 0.0
      $region36: #{multi_head_attention.4} parent=31 // pred_fallthru
        _
      %v292 = vld [vmem:[%s256] sm:$0xff]
      %v293 = vld [vmem:[%s266] sm:$0xff]
      %v294 = vld [vmem:[%s276] sm:$0xff]
      %vm295 = vcmask 261120
      %v297 = vsel %vm295, %v292, 0
      %v300 = vsel %vm295, %v293, 0
      %302 = vmatprep.subr.mxu0 0.0
      %303 = vmatpush1.xpose.msra.mxu0 %v300
      %304 = vmatprep.subr.mxu0 0.0
      %305 = vmatpush1.xpose.msra.mxu0 0.0
      %306 = vmatprep.subr.mxu0 0.0
      %307 = vmatpush1.xpose.msra.mxu0 0.0
      %308 = vmatprep.subr.mxu0 0.0
      %309 = vmatpush1.xpose.msra.mxu0 0.0
      %310 = vmatprep.subr.mxu0 0.0
      %311 = vmatpush1.xpose.msra.mxu0 0.0
      %312 = vmatprep.subr.mxu0 0.0
      %313 = vmatpush1.xpose.msra.mxu0 0.0
      %314 = vmatprep.subr.mxu0 0.0
      %315 = vmatpush1.xpose.msra.mxu0 0.0
      %316 = vmatprep.subr.mxu0 0.0
      %317 = vmatpush1.xpose.msra.mxu0 0.0
      %318 = vmatprep.subr.mxu0 0.0
      %319 = vmatpush1.xpose.msra.mxu0 0.0
      %320 = vmatprep.subr.mxu0 0.0
      %321 = vmatpush1.xpose.msra.mxu0 0.0
      %322 = vmatprep.subr.mxu0 0.0
      %323 = vmatpush1.xpose.msra.mxu0 0.0
      %324 = vmatprep.subr.mxu0 0.0
      %325 = vmatpush1.xpose.msra.mxu0 0.0
      %326 = vmatprep.subr.mxu0 0.0
      %327 = vmatpush1.xpose.msra.mxu0 0.0
      %328 = vmatprep.subr.mxu0 0.0
      %329 = vmatpush1.xpose.msra.mxu0 0.0
      %330 = vmatprep.subr.mxu0 0.0
      %331 = vmatpush1.xpose.msra.mxu0 0.0
      %332 = vmatprep.subr.mxu0 0.0
      %333 = vmatpush1.xpose.msra.mxu0 0.0
      %334 = vmatprep.subr.mxu0 0.0
      %335 = vmatpush1.xpose.msra.mxu0 0.0
      %336 = vmatprep.subr.mxu0 0.0
      %337 = vmatpush1.xpose.msra.mxu0 0.0
      %338 = vmatprep.subr.mxu0 0.0
      %339 = vmatpush1.xpose.msra.mxu0 0.0
      %340 = vmatprep.subr.mxu0 0.0
      %341 = vmatpush1.xpose.msra.mxu0 0.0
      %342 = vmatprep.subr.mxu0 0.0
      %343 = vmatpush1.xpose.msra.mxu0 0.0
      %344 = vmatprep.subr.mxu0 0.0
      %345 = vmatpush1.xpose.msra.mxu0 0.0
      %346 = vmatprep.subr.mxu0 0.0
      %347 = vmatpush1.xpose.msra.mxu0 0.0
      %348 = vmatprep.subr.mxu0 0.0
      %349 = vmatpush1.xpose.msra.mxu0 0.0
      %350 = vmatprep.subr.mxu0 0.0
      %351 = vmatpush1.xpose.msra.mxu0 0.0
      %352 = vmatprep.subr.mxu0 0.0
      %353 = vmatpush1.xpose.msra.mxu0 0.0
      %354 = vmatprep.subr.mxu0 0.0
      %355 = vmatpush1.xpose.msra.mxu0 0.0
      %356 = vmatprep.subr.mxu0 0.0
      %357 = vmatpush1.xpose.msra.mxu0 0.0
      %358 = vmatprep.subr.mxu0 0.0
      %359 = vmatpush1.xpose.msra.mxu0 0.0
      %360 = vmatprep.subr.mxu0 0.0
      %361 = vmatpush1.xpose.msra.mxu0 0.0
      %362 = vmatprep.subr.mxu0 0.0
      %363 = vmatpush1.xpose.msra.mxu0 0.0
      %364 = vmatprep.subr.mxu0 0.0
      %365 = vmatpush1.xpose.msra.mxu0 0.0
      %366 = vmatprep.mubr.f32.mxu0 0.0
      %367 = vmatmul.mubr.f32.gmra.mrb[0].mxu0 %v297
      %v368 = vpop.f32.mrb[0].mxu0
      %v369 = vadd.f32 0.0, %v368
      %v370 = vpop.f32.mrb[0].mxu0
      %371 = vdwg.mxu0
      %v372 = vld [vmem:[#allocation2] sm:$0xff]
      %vm373 = vcmask 64512
      %v374 = vsel %vm373, %v369, -inf
      %375 = vmax.xlane.f32.xlu0 %v374
      %v376 = vpop.xlane.xlu0 %375
      %v377 = vmax.f32 %v372, %v376
      %v378 = vsub.f32 %v372, %v377
      %v379 = vmul.f32 %v378, 1.442695
      %v380 = vpow.pop %v379
      %382 = vset.pattern.permute.xlu0 0
      %383 = vperm.xlu0 %382, %v377
      %v384 = vpop.permute.xlu0 %383
      %v386 = vsub.f32 %v369, %v384
      %v387 = vmul.f32 %v386, 1.442695
      %v388 = vpow.pop %v387
      %v389 = vld [vmem:[#allocation3] sm:$0xff]
      %v390 = vmul.f32 %v380, %v389
      %v391 = vsel %vm373, %v388, 0.0
      %392 = vadd.xlane.f32.xlu0 %v391
      %v393 = vpop.xlane.xlu0 %392
      %v394 = vadd.f32 %v390, %v393
      %vm395 = vcmask 7168
      %396 = vst.msk [vmem:[#allocation3] sm:$0xff] %vm395, %v394
      %397 = vst.msk [vmem:[#allocation2] sm:$0xff] %vm395, %v377
      %v399 = vsel %vm373, %v388, 0
      %401 = vmatprep.subr.mxu0 0.0
      %402 = vmatpush1.msra.mxu0 %v294
      %403 = vmatprep.subr.mxu0 0.0
      %404 = vmatpush1.msra.mxu0 0.0
      %405 = vmatprep.subr.mxu0 0.0
      %406 = vmatpush1.msra.mxu0 0.0
      %407 = vmatprep.subr.mxu0 0.0
      %408 = vmatpush1.msra.mxu0 0.0
      %409 = vmatprep.subr.mxu0 0.0
      %410 = vmatpush1.msra.mxu0 0.0
      %411 = vmatprep.subr.mxu0 0.0
      %412 = vmatpush1.msra.mxu0 0.0
      %413 = vmatprep.subr.mxu0 0.0
      %414 = vmatpush1.msra.mxu0 0.0
      %415 = vmatprep.subr.mxu0 0.0
      %416 = vmatpush1.msra.mxu0 0.0
      %417 = vmatprep.subr.mxu0 0.0
      %418 = vmatpush1.msra.mxu0 0.0
      %419 = vmatprep.subr.mxu0 0.0
      %420 = vmatpush1.msra.mxu0 0.0
      %421 = vmatprep.subr.mxu0 0.0
      %422 = vmatpush1.msra.mxu0 0.0
      %423 = vmatprep.subr.mxu0 0.0
      %424 = vmatpush1.msra.mxu0 0.0
      %425 = vmatprep.subr.mxu0 0.0
      %426 = vmatpush1.msra.mxu0 0.0
      %427 = vmatprep.subr.mxu0 0.0
      %428 = vmatpush1.msra.mxu0 0.0
      %429 = vmatprep.subr.mxu0 0.0
      %430 = vmatpush1.msra.mxu0 0.0
      %431 = vmatprep.subr.mxu0 0.0
      %432 = vmatpush1.msra.mxu0 0.0
      %433 = vmatprep.subr.mxu0 0.0
      %434 = vmatpush1.msra.mxu0 0.0
      %435 = vmatprep.subr.mxu0 0.0
      %436 = vmatpush1.msra.mxu0 0.0
      %437 = vmatprep.subr.mxu0 0.0
      %438 = vmatpush1.msra.mxu0 0.0
      %439 = vmatprep.subr.mxu0 0.0
      %440 = vmatpush1.msra.mxu0 0.0
      %441 = vmatprep.subr.mxu0 0.0
      %442 = vmatpush1.msra.mxu0 0.0
      %443 = vmatprep.subr.mxu0 0.0
      %444 = vmatpush1.msra.mxu0 0.0
      %445 = vmatprep.subr.mxu0 0.0
      %446 = vmatpush1.msra.mxu0 0.0
      %447 = vmatprep.subr.mxu0 0.0
      %448 = vmatpush1.msra.mxu0 0.0
      %449 = vmatprep.subr.mxu0 0.0
      %450 = vmatpush1.msra.mxu0 0.0
      %451 = vmatprep.subr.mxu0 0.0
      %452 = vmatpush1.msra.mxu0 0.0
      %453 = vmatprep.subr.mxu0 0.0
      %454 = vmatpush1.msra.mxu0 0.0
      %455 = vmatprep.subr.mxu0 0.0
      %456 = vmatpush1.msra.mxu0 0.0
      %457 = vmatprep.subr.mxu0 0.0
      %458 = vmatpush1.msra.mxu0 0.0
      %459 = vmatprep.subr.mxu0 0.0
      %460 = vmatpush1.msra.mxu0 0.0
      %461 = vmatprep.subr.mxu0 0.0
      %462 = vmatpush1.msra.mxu0 0.0
      %463 = vmatprep.subr.mxu0 0.0
      %464 = vmatpush1.msra.mxu0 0.0
      %465 = vmatprep.mubr.f32.mxu0 0.0
      %466 = vmatmul.mubr.f32.gmra.mrb[0].mxu0 %v399
      %v467 = vpop.f32.mrb[0].mxu0
      %v468 = vadd.f32 0.0, %v467
      %v469 = vpop.f32.mrb[0].mxu0
      %470 = vdwg.mxu0
      %v471 = vld [vmem:[#allocation4] sm:$0xff]
      %473 = vset.pattern.permute.xlu0 0
      %474 = vperm.xlu0 %473, %v380
      %v475 = vpop.permute.xlu0 %474
      %v477 = vmul.f32 %v475, %v471
      %v478 = vadd.f32 %v477, %v468
      %479 = vst.msk [vmem:[#allocation4] sm:$0xff] %vm295, %v478
      %480 = vrot.lane.b32.xlu0 %v292, 96
      %v481 = vpop.permute.xlu0 %480
      %482 = vrot.lane.b32.xlu0 %v293, 96
      %v483 = vpop.permute.xlu0 %482
      %v484 = vsel %vm295, %v481, 0
      %v486 = vsel %vm295, %v483, 0
      %488 = vmatprep.subr.mxu0 0.0
      %489 = vmatpush1.xpose.msra.mxu0 %v486
      %490 = vmatprep.subr.mxu0 0.0
      %491 = vmatpush1.xpose.msra.mxu0 0.0
      %492 = vmatprep.subr.mxu0 0.0
      %493 = vmatpush1.xpose.msra.mxu0 0.0
      %494 = vmatprep.subr.mxu0 0.0
      %495 = vmatpush1.xpose.msra.mxu0 0.0
      %496 = vmatprep.subr.mxu0 0.0
      %497 = vmatpush1.xpose.msra.mxu0 0.0
      %498 = vmatprep.subr.mxu0 0.0
      %499 = vmatpush1.xpose.msra.mxu0 0.0
      %500 = vmatprep.subr.mxu0 0.0
      %501 = vmatpush1.xpose.msra.mxu0 0.0
      %502 = vmatprep.subr.mxu0 0.0
      %503 = vmatpush1.xpose.msra.mxu0 0.0
      %504 = vmatprep.subr.mxu0 0.0
      %505 = vmatpush1.xpose.msra.mxu0 0.0
      %506 = vmatprep.subr.mxu0 0.0
      %507 = vmatpush1.xpose.msra.mxu0 0.0
      %508 = vmatprep.subr.mxu0 0.0
      %509 = vmatpush1.xpose.msra.mxu0 0.0
      %510 = vmatprep.subr.mxu0 0.0
      %511 = vmatpush1.xpose.msra.mxu0 0.0
      %512 = vmatprep.subr.mxu0 0.0
      %513 = vmatpush1.xpose.msra.mxu0 0.0
      %514 = vmatprep.subr.mxu0 0.0
      %515 = vmatpush1.xpose.msra.mxu0 0.0
      %516 = vmatprep.subr.mxu0 0.0
      %517 = vmatpush1.xpose.msra.mxu0 0.0
      %518 = vmatprep.subr.mxu0 0.0
      %519 = vmatpush1.xpose.msra.mxu0 0.0
      %520 = vmatprep.subr.mxu0 0.0
      %521 = vmatpush1.xpose.msra.mxu0 0.0
      %522 = vmatprep.subr.mxu0 0.0
      %523 = vmatpush1.xpose.msra.mxu0 0.0
      %524 = vmatprep.subr.mxu0 0.0
      %525 = vmatpush1.xpose.msra.mxu0 0.0
      %526 = vmatprep.subr.mxu0 0.0
      %527 = vmatpush1.xpose.msra.mxu0 0.0
      %528 = vmatprep.subr.mxu0 0.0
      %529 = vmatpush1.xpose.msra.mxu0 0.0
      %530 = vmatprep.subr.mxu0 0.0
      %531 = vmatpush1.xpose.msra.mxu0 0.0
      %532 = vmatprep.subr.mxu0 0.0
      %533 = vmatpush1.xpose.msra.mxu0 0.0
      %534 = vmatprep.subr.mxu0 0.0
      %535 = vmatpush1.xpose.msra.mxu0 0.0
      %536 = vmatprep.subr.mxu0 0.0
      %537 = vmatpush1.xpose.msra.mxu0 0.0
      %538 = vmatprep.subr.mxu0 0.0
      %539 = vmatpush1.xpose.msra.mxu0 0.0
      %540 = vmatprep.subr.mxu0 0.0
      %541 = vmatpush1.xpose.msra.mxu0 0.0
      %542 = vmatprep.subr.mxu0 0.0
      %543 = vmatpush1.xpose.msra.mxu0 0.0
      %544 = vmatprep.subr.mxu0 0.0
      %545 = vmatpush1.xpose.msra.mxu0 0.0
      %546 = vmatprep.subr.mxu0 0.0
      %547 = vmatpush1.xpose.msra.mxu0 0.0
      %548 = vmatprep.subr.mxu0 0.0
      %549 = vmatpush1.xpose.msra.mxu0 0.0
      %550 = vmatprep.subr.mxu0 0.0
      %551 = vmatpush1.xpose.msra.mxu0 0.0
      %552 = vmatprep.mubr.f32.mxu0 0.0
      %553 = vmatmul.mubr.f32.gmra.mrb[0].mxu0 %v484
      %v554 = vpop.f32.mrb[0].mxu0
      %v555 = vadd.f32 0.0, %v554
      %v556 = vpop.f32.mrb[0].mxu0
      %557 = vdwg.mxu0
      %v558 = vld [vmem:[#allocation2] sm:$0xff]
      %v559 = vsel %vm373, %v555, -inf
      %560 = vmax.xlane.f32.xlu0 %v559
      %v561 = vpop.xlane.xlu0 %560
      %v562 = vmax.f32 %v558, %v561
      %v563 = vsub.f32 %v558, %v562
      %v564 = vmul.f32 %v563, 1.442695
      %v565 = vpow.pop %v564
      %567 = vset.pattern.permute.xlu0 1
      %568 = vperm.xlu0 %567, %v562
      %v569 = vpop.permute.xlu0 %568
      %v571 = vsub.f32 %v555, %v569
      %v572 = vmul.f32 %v571, 1.442695
      %v573 = vpow.pop %v572
      %v574 = vld [vmem:[#allocation3] sm:$0xff]
      %v575 = vmul.f32 %v565, %v574
      %v576 = vsel %vm373, %v573, 0.0
      %577 = vadd.xlane.f32.xlu0 %v576
      %v578 = vpop.xlane.xlu0 %577
      %v579 = vadd.f32 %v575, %v578
      %vm580 = vcmask 15368
      %581 = vst.msk [vmem:[#allocation3] sm:$0xff] %vm580, %v579
      %582 = vst.msk [vmem:[#allocation2] sm:$0xff] %vm580, %v562
      %584 = vrot.lane.b32.xlu0 %v294, 96
      %v585 = vpop.permute.xlu0 %584
      %v588 = vsel %vm373, %v573, 0
      %590 = vmatprep.subr.mxu0 0.0
      %591 = vmatpush1.msra.mxu0 %v585
      %592 = vmatprep.subr.mxu0 0.0
      %593 = vmatpush1.msra.mxu0 0.0
      %594 = vmatprep.subr.mxu0 0.0
      %595 = vmatpush1.msra.mxu0 0.0
      %596 = vmatprep.subr.mxu0 0.0
      %597 = vmatpush1.msra.mxu0 0.0
      %598 = vmatprep.subr.mxu0 0.0
      %599 = vmatpush1.msra.mxu0 0.0
      %600 = vmatprep.subr.mxu0 0.0
      %601 = vmatpush1.msra.mxu0 0.0
      %602 = vmatprep.subr.mxu0 0.0
      %603 = vmatpush1.msra.mxu0 0.0
      %604 = vmatprep.subr.mxu0 0.0
      %605 = vmatpush1.msra.mxu0 0.0
      %606 = vmatprep.subr.mxu0 0.0
      %607 = vmatpush1.msra.mxu0 0.0
      %608 = vmatprep.subr.mxu0 0.0
      %609 = vmatpush1.msra.mxu0 0.0
      %610 = vmatprep.subr.mxu0 0.0
      %611 = vmatpush1.msra.mxu0 0.0
      %612 = vmatprep.subr.mxu0 0.0
      %613 = vmatpush1.msra.mxu0 0.0
      %614 = vmatprep.subr.mxu0 0.0
      %615 = vmatpush1.msra.mxu0 0.0
      %616 = vmatprep.subr.mxu0 0.0
      %617 = vmatpush1.msra.mxu0 0.0
      %618 = vmatprep.subr.mxu0 0.0
      %619 = vmatpush1.msra.mxu0 0.0
      %620 = vmatprep.subr.mxu0 0.0
      %621 = vmatpush1.msra.mxu0 0.0
      %622 = vmatprep.subr.mxu0 0.0
      %623 = vmatpush1.msra.mxu0 0.0
      %624 = vmatprep.subr.mxu0 0.0
      %625 = vmatpush1.msra.mxu0 0.0
      %626 = vmatprep.subr.mxu0 0.0
      %627 = vmatpush1.msra.mxu0 0.0
      %628 = vmatprep.subr.mxu0 0.0
      %629 = vmatpush1.msra.mxu0 0.0
      %630 = vmatprep.subr.mxu0 0.0
      %631 = vmatpush1.msra.mxu0 0.0
      %632 = vmatprep.subr.mxu0 0.0
      %633 = vmatpush1.msra.mxu0 0.0
      %634 = vmatprep.subr.mxu0 0.0
      %635 = vmatpush1.msra.mxu0 0.0
      %636 = vmatprep.subr.mxu0 0.0
      %637 = vmatpush1.msra.mxu0 0.0
      %638 = vmatprep.subr.mxu0 0.0
      %639 = vmatpush1.msra.mxu0 0.0
      %640 = vmatprep.subr.mxu0 0.0
      %641 = vmatpush1.msra.mxu0 0.0
      %642 = vmatprep.subr.mxu0 0.0
      %643 = vmatpush1.msra.mxu0 0.0
      %644 = vmatprep.subr.mxu0 0.0
      %645 = vmatpush1.msra.mxu0 0.0
      %646 = vmatprep.subr.mxu0 0.0
      %647 = vmatpush1.msra.mxu0 0.0
      %648 = vmatprep.subr.mxu0 0.0
      %649 = vmatpush1.msra.mxu0 0.0
      %650 = vmatprep.subr.mxu0 0.0
      %651 = vmatpush1.msra.mxu0 0.0
      %652 = vmatprep.subr.mxu0 0.0
      %653 = vmatpush1.msra.mxu0 0.0
      %654 = vmatprep.mubr.f32.mxu0 0.0
      %655 = vmatmul.mubr.f32.gmra.mrb[0].mxu0 %v588
      %v656 = vpop.f32.mrb[0].mxu0
      %v657 = vadd.f32 0.0, %v656
      %v658 = vpop.f32.mrb[0].mxu0
      %659 = vdwg.mxu0
      %v660 = vld [vmem:[#allocation4] sm:$0xff]
      %662 = vset.pattern.permute.xlu0 1
      %663 = vperm.xlu0 %662, %v565
      %v664 = vpop.permute.xlu0 %663
      %v666 = vmul.f32 %v664, %v660
      %668 = vrot.lane.b32.xlu0 %v657, 32
      %v669 = vpop.permute.xlu0 %668
      %v671 = vadd.f32 %v666, %v669
      %vm672 = vcmask 523520
      %673 = vst.msk [vmem:[#allocation4] sm:$0xff] %vm672, %v671
      %674 = vrot.lane.b32.xlu0 %v292, 64
      %v675 = vpop.permute.xlu0 %674
      %676 = vrot.lane.b32.xlu0 %v293, 64
      %v677 = vpop.permute.xlu0 %676
      %v678 = vsel %vm295, %v675, 0
      %v680 = vsel %vm295, %v677, 0
      %682 = vmatprep.subr.mxu0 0.0
      %683 = vmatpush1.xpose.msra.mxu0 %v680
      %684 = vmatprep.subr.mxu0 0.0
      %685 = vmatpush1.xpose.msra.mxu0 0.0
      %686 = vmatprep.subr.mxu0 0.0
      %687 = vmatpush1.xpose.msra.mxu0 0.0
      %688 = vmatprep.subr.mxu0 0.0
      %689 = vmatpush1.xpose.msra.mxu0 0.0
      %690 = vmatprep.subr.mxu0 0.0
      %691 = vmatpush1.xpose.msra.mxu0 0.0
      %692 = vmatprep.subr.mxu0 0.0
      %693 = vmatpush1.xpose.msra.mxu0 0.0
      %694 = vmatprep.subr.mxu0 0.0
      %695 = vmatpush1.xpose.msra.mxu0 0.0
      %696 = vmatprep.subr.mxu0 0.0
      %697 = vmatpush1.xpose.msra.mxu0 0.0
      %698 = vmatprep.subr.mxu0 0.0
      %699 = vmatpush1.xpose.msra.mxu0 0.0
      %700 = vmatprep.subr.mxu0 0.0
      %701 = vmatpush1.xpose.msra.mxu0 0.0
      %702 = vmatprep.subr.mxu0 0.0
      %703 = vmatpush1.xpose.msra.mxu0 0.0
      %704 = vmatprep.subr.mxu0 0.0
      %705 = vmatpush1.xpose.msra.mxu0 0.0
      %706 = vmatprep.subr.mxu0 0.0
      %707 = vmatpush1.xpose.msra.mxu0 0.0
      %708 = vmatprep.subr.mxu0 0.0
      %709 = vmatpush1.xpose.msra.mxu0 0.0
      %710 = vmatprep.subr.mxu0 0.0
      %711 = vmatpush1.xpose.msra.mxu0 0.0
      %712 = vmatprep.subr.mxu0 0.0
      %713 = vmatpush1.xpose.msra.mxu0 0.0
      %714 = vmatprep.subr.mxu0 0.0
      %715 = vmatpush1.xpose.msra.mxu0 0.0
      %716 = vmatprep.subr.mxu0 0.0
      %717 = vmatpush1.xpose.msra.mxu0 0.0
      %718 = vmatprep.subr.mxu0 0.0
      %719 = vmatpush1.xpose.msra.mxu0 0.0
      %720 = vmatprep.subr.mxu0 0.0
      %721 = vmatpush1.xpose.msra.mxu0 0.0
      %722 = vmatprep.subr.mxu0 0.0
      %723 = vmatpush1.xpose.msra.mxu0 0.0
      %724 = vmatprep.subr.mxu0 0.0
      %725 = vmatpush1.xpose.msra.mxu0 0.0
      %726 = vmatprep.subr.mxu0 0.0
      %727 = vmatpush1.xpose.msra.mxu0 0.0
      %728 = vmatprep.subr.mxu0 0.0
      %729 = vmatpush1.xpose.msra.mxu0 0.0
      %730 = vmatprep.subr.mxu0 0.0
      %731 = vmatpush1.xpose.msra.mxu0 0.0
      %732 = vmatprep.subr.mxu0 0.0
      %733 = vmatpush1.xpose.msra.mxu0 0.0
      %734 = vmatprep.subr.mxu0 0.0
      %735 = vmatpush1.xpose.msra.mxu0 0.0
      %736 = vmatprep.subr.mxu0 0.0
      %737 = vmatpush1.xpose.msra.mxu0 0.0
      %738 = vmatprep.subr.mxu0 0.0
      %739 = vmatpush1.xpose.msra.mxu0 0.0
      %740 = vmatprep.subr.mxu0 0.0
      %741 = vmatpush1.xpose.msra.mxu0 0.0
      %742 = vmatprep.subr.mxu0 0.0
      %743 = vmatpush1.xpose.msra.mxu0 0.0
      %744 = vmatprep.subr.mxu0 0.0
      %745 = vmatpush1.xpose.msra.mxu0 0.0
      %746 = vmatprep.mubr.f32.mxu0 0.0
      %747 = vmatmul.mubr.f32.gmra.mrb[0].mxu0 %v678
      %v748 = vpop.f32.mrb[0].mxu0
      %v749 = vadd.f32 0.0, %v748
      %v750 = vpop.f32.mrb[0].mxu0
      %751 = vdwg.mxu0
      %v752 = vld [vmem:[#allocation2] sm:$0xff]
      %v753 = vsel %vm373, %v749, -inf
      %754 = vmax.xlane.f32.xlu0 %v753
      %v755 = vpop.xlane.xlu0 %754
      %v756 = vmax.f32 %v752, %v755
      %v757 = vsub.f32 %v752, %v756
      %v758 = vmul.f32 %v757, 1.442695
      %v759 = vpow.pop %v758
      %761 = vset.pattern.permute.xlu0 2
      %762 = vperm.xlu0 %761, %v756
      %v763 = vpop.permute.xlu0 %762
      %v765 = vsub.f32 %v749, %v763
      %v766 = vmul.f32 %v765, 1.442695
      %v767 = vpow.pop %v766
      %v768 = vld [vmem:[#allocation3] sm:$0xff]
      %v769 = vmul.f32 %v759, %v768
      %v770 = vsel %vm373, %v767, 0.0
      %771 = vadd.xlane.f32.xlu0 %v770
      %v772 = vpop.xlane.xlu0 %771
      %v773 = vadd.f32 %v769, %v772
      %vm774 = vcmask 23568
      %775 = vst.msk [vmem:[#allocation3] sm:$0xff] %vm774, %v773
      %776 = vst.msk [vmem:[#allocation2] sm:$0xff] %vm774, %v756
      %777 = vrot.lane.b32.xlu0 %v294, 64
      %v778 = vpop.permute.xlu0 %777
      %v781 = vsel %vm373, %v767, 0
      %783 = vmatprep.subr.mxu0 0.0
      %784 = vmatpush1.msra.mxu0 %v778
      %785 = vmatprep.subr.mxu0 0.0
      %786 = vmatpush1.msra.mxu0 0.0
      %787 = vmatprep.subr.mxu0 0.0
      %788 = vmatpush1.msra.mxu0 0.0
      %789 = vmatprep.subr.mxu0 0.0
      %790 = vmatpush1.msra.mxu0 0.0
      %791 = vmatprep.subr.mxu0 0.0
      %792 = vmatpush1.msra.mxu0 0.0
      %793 = vmatprep.subr.mxu0 0.0
      %794 = vmatpush1.msra.mxu0 0.0
      %795 = vmatprep.subr.mxu0 0.0
      %796 = vmatpush1.msra.mxu0 0.0
      %797 = vmatprep.subr.mxu0 0.0
      %798 = vmatpush1.msra.mxu0 0.0
      %799 = vmatprep.subr.mxu0 0.0
      %800 = vmatpush1.msra.mxu0 0.0
      %801 = vmatprep.subr.mxu0 0.0
      %802 = vmatpush1.msra.mxu0 0.0
      %803 = vmatprep.subr.mxu0 0.0
      %804 = vmatpush1.msra.mxu0 0.0
      %805 = vmatprep.subr.mxu0 0.0
      %806 = vmatpush1.msra.mxu0 0.0
      %807 = vmatprep.subr.mxu0 0.0
      %808 = vmatpush1.msra.mxu0 0.0
      %809 = vmatprep.subr.mxu0 0.0
      %810 = vmatpush1.msra.mxu0 0.0
      %811 = vmatprep.subr.mxu0 0.0
      %812 = vmatpush1.msra.mxu0 0.0
      %813 = vmatprep.subr.mxu0 0.0
      %814 = vmatpush1.msra.mxu0 0.0
      %815 = vmatprep.subr.mxu0 0.0
      %816 = vmatpush1.msra.mxu0 0.0
      %817 = vmatprep.subr.mxu0 0.0
      %818 = vmatpush1.msra.mxu0 0.0
      %819 = vmatprep.subr.mxu0 0.0
      %820 = vmatpush1.msra.mxu0 0.0
      %821 = vmatprep.subr.mxu0 0.0
      %822 = vmatpush1.msra.mxu0 0.0
      %823 = vmatprep.subr.mxu0 0.0
      %824 = vmatpush1.msra.mxu0 0.0
      %825 = vmatprep.subr.mxu0 0.0
      %826 = vmatpush1.msra.mxu0 0.0
      %827 = vmatprep.subr.mxu0 0.0
      %828 = vmatpush1.msra.mxu0 0.0
      %829 = vmatprep.subr.mxu0 0.0
      %830 = vmatpush1.msra.mxu0 0.0
      %831 = vmatprep.subr.mxu0 0.0
      %832 = vmatpush1.msra.mxu0 0.0
      %833 = vmatprep.subr.mxu0 0.0
      %834 = vmatpush1.msra.mxu0 0.0
      %835 = vmatprep.subr.mxu0 0.0
      %836 = vmatpush1.msra.mxu0 0.0
      %837 = vmatprep.subr.mxu0 0.0
      %838 = vmatpush1.msra.mxu0 0.0
      %839 = vmatprep.subr.mxu0 0.0
      %840 = vmatpush1.msra.mxu0 0.0
      %841 = vmatprep.subr.mxu0 0.0
      %842 = vmatpush1.msra.mxu0 0.0
      %843 = vmatprep.subr.mxu0 0.0
      %844 = vmatpush1.msra.mxu0 0.0
      %845 = vmatprep.subr.mxu0 0.0
      %846 = vmatpush1.msra.mxu0 0.0
      %847 = vmatprep.mubr.f32.mxu0 0.0
      %848 = vmatmul.mubr.f32.gmra.mrb[0].mxu0 %v781
      %v849 = vpop.f32.mrb[0].mxu0
      %v850 = vadd.f32 0.0, %v849
      %v851 = vpop.f32.mrb[0].mxu0
      %852 = vdwg.mxu0
      %v853 = vld [vmem:[#allocation4] sm:$0xff]
      %855 = vset.pattern.permute.xlu0 2
      %856 = vperm.xlu0 %855, %v759
      %v857 = vpop.permute.xlu0 %856
      %v859 = vmul.f32 %v857, %v853
      %861 = vrot.lane.b32.xlu0 %v850, 64
      %v862 = vpop.permute.xlu0 %861
      %v864 = vadd.f32 %v859, %v862
      %vm865 = vcmask 785920
      %866 = vst.msk [vmem:[#allocation4] sm:$0xff] %vm865, %v864
      %867 = vrot.lane.b32.xlu0 %v292, 32
      %v868 = vpop.permute.xlu0 %867
      %869 = vrot.lane.b32.xlu0 %v293, 32
      %v870 = vpop.permute.xlu0 %869
      %v871 = vsel %vm295, %v868, 0
      %v873 = vsel %vm295, %v870, 0
      %875 = vmatprep.subr.mxu0 0.0
      %876 = vmatpush1.xpose.msra.mxu0 %v873
      %877 = vmatprep.subr.mxu0 0.0
      %878 = vmatpush1.xpose.msra.mxu0 0.0
      %879 = vmatprep.subr.mxu0 0.0
      %880 = vmatpush1.xpose.msra.mxu0 0.0
      %881 = vmatprep.subr.mxu0 0.0
      %882 = vmatpush1.xpose.msra.mxu0 0.0
      %883 = vmatprep.subr.mxu0 0.0
      %884 = vmatpush1.xpose.msra.mxu0 0.0
      %885 = vmatprep.subr.mxu0 0.0
      %886 = vmatpush1.xpose.msra.mxu0 0.0
      %887 = vmatprep.subr.mxu0 0.0
      %888 = vmatpush1.xpose.msra.mxu0 0.0
      %889 = vmatprep.subr.mxu0 0.0
      %890 = vmatpush1.xpose.msra.mxu0 0.0
      %891 = vmatprep.subr.mxu0 0.0
      %892 = vmatpush1.xpose.msra.mxu0 0.0
      %893 = vmatprep.subr.mxu0 0.0
      %894 = vmatpush1.xpose.msra.mxu0 0.0
      %895 = vmatprep.subr.mxu0 0.0
      %896 = vmatpush1.xpose.msra.mxu0 0.0
      %897 = vmatprep.subr.mxu0 0.0
      %898 = vmatpush1.xpose.msra.mxu0 0.0
      %899 = vmatprep.subr.mxu0 0.0
      %900 = vmatpush1.xpose.msra.mxu0 0.0
      %901 = vmatprep.subr.mxu0 0.0
      %902 = vmatpush1.xpose.msra.mxu0 0.0
      %903 = vmatprep.subr.mxu0 0.0
      %904 = vmatpush1.xpose.msra.mxu0 0.0
      %905 = vmatprep.subr.mxu0 0.0
      %906 = vmatpush1.xpose.msra.mxu0 0.0
      %907 = vmatprep.subr.mxu0 0.0
      %908 = vmatpush1.xpose.msra.mxu0 0.0
      %909 = vmatprep.subr.mxu0 0.0
      %910 = vmatpush1.xpose.msra.mxu0 0.0
      %911 = vmatprep.subr.mxu0 0.0
      %912 = vmatpush1.xpose.msra.mxu0 0.0
      %913 = vmatprep.subr.mxu0 0.0
      %914 = vmatpush1.xpose.msra.mxu0 0.0
      %915 = vmatprep.subr.mxu0 0.0
      %916 = vmatpush1.xpose.msra.mxu0 0.0
      %917 = vmatprep.subr.mxu0 0.0
      %918 = vmatpush1.xpose.msra.mxu0 0.0
      %919 = vmatprep.subr.mxu0 0.0
      %920 = vmatpush1.xpose.msra.mxu0 0.0
      %921 = vmatprep.subr.mxu0 0.0
      %922 = vmatpush1.xpose.msra.mxu0 0.0
      %923 = vmatprep.subr.mxu0 0.0
      %924 = vmatpush1.xpose.msra.mxu0 0.0
      %925 = vmatprep.subr.mxu0 0.0
      %926 = vmatpush1.xpose.msra.mxu0 0.0
      %927 = vmatprep.subr.mxu0 0.0
      %928 = vmatpush1.xpose.msra.mxu0 0.0
      %929 = vmatprep.subr.mxu0 0.0
      %930 = vmatpush1.xpose.msra.mxu0 0.0
      %931 = vmatprep.subr.mxu0 0.0
      %932 = vmatpush1.xpose.msra.mxu0 0.0
      %933 = vmatprep.subr.mxu0 0.0
      %934 = vmatpush1.xpose.msra.mxu0 0.0
      %935 = vmatprep.subr.mxu0 0.0
      %936 = vmatpush1.xpose.msra.mxu0 0.0
      %937 = vmatprep.subr.mxu0 0.0
      %938 = vmatpush1.xpose.msra.mxu0 0.0
      %939 = vmatprep.mubr.f32.mxu0 0.0
      %940 = vmatmul.mubr.f32.gmra.mrb[0].mxu0 %v871
      %v941 = vpop.f32.mrb[0].mxu0
      %v942 = vadd.f32 0.0, %v941
      %v943 = vpop.f32.mrb[0].mxu0
      %944 = vdwg.mxu0
      %v945 = vld [vmem:[#allocation2] sm:$0xff]
      %v946 = vsel %vm373, %v942, -inf
      %947 = vmax.xlane.f32.xlu0 %v946
      %v948 = vpop.xlane.xlu0 %947
      %v949 = vmax.f32 %v945, %v948
      %v950 = vsub.f32 %v945, %v949
      %v951 = vmul.f32 %v950, 1.442695
      %v952 = vpow.pop %v951
      %954 = vset.pattern.permute.xlu0 3
      %955 = vperm.xlu0 %954, %v949
      %v956 = vpop.permute.xlu0 %955
      %v958 = vsub.f32 %v942, %v956
      %v959 = vmul.f32 %v958, 1.442695
      %v960 = vpow.pop %v959
      %v961 = vld [vmem:[#allocation3] sm:$0xff]
      %v962 = vmul.f32 %v952, %v961
      %v963 = vsel %vm373, %v960, 0.0
      %964 = vadd.xlane.f32.xlu0 %v963
      %v965 = vpop.xlane.xlu0 %964
      %v966 = vadd.f32 %v962, %v965
      %vm967 = vcmask 31768
      %968 = vst.msk [vmem:[#allocation3] sm:$0xff] %vm967, %v966
      %969 = vst.msk [vmem:[#allocation2] sm:$0xff] %vm967, %v949
      %970 = vrot.lane.b32.xlu0 %v294, 32
      %v971 = vpop.permute.xlu0 %970
      %v974 = vsel %vm373, %v960, 0
      %976 = vmatprep.subr.mxu0 0.0
      %977 = vmatpush1.msra.mxu0 %v971
      %978 = vmatprep.subr.mxu0 0.0
      %979 = vmatpush1.msra.mxu0 0.0
      %980 = vmatprep.subr.mxu0 0.0
      %981 = vmatpush1.msra.mxu0 0.0
      %982 = vmatprep.subr.mxu0 0.0
      %983 = vmatpush1.msra.mxu0 0.0
      %984 = vmatprep.subr.mxu0 0.0
      %985 = vmatpush1.msra.mxu0 0.0
      %986 = vmatprep.subr.mxu0 0.0
      %987 = vmatpush1.msra.mxu0 0.0
      %988 = vmatprep.subr.mxu0 0.0
      %989 = vmatpush1.msra.mxu0 0.0
      %990 = vmatprep.subr.mxu0 0.0
      %991 = vmatpush1.msra.mxu0 0.0
      %992 = vmatprep.subr.mxu0 0.0
      %993 = vmatpush1.msra.mxu0 0.0
      %994 = vmatprep.subr.mxu0 0.0
      %995 = vmatpush1.msra.mxu0 0.0
      %996 = vmatprep.subr.mxu0 0.0
      %997 = vmatpush1.msra.mxu0 0.0
      %998 = vmatprep.subr.mxu0 0.0
      %999 = vmatpush1.msra.mxu0 0.0
      %1000 = vmatprep.subr.mxu0 0.0
      %1001 = vmatpush1.msra.mxu0 0.0
      %1002 = vmatprep.subr.mxu0 0.0
      %1003 = vmatpush1.msra.mxu0 0.0
      %1004 = vmatprep.subr.mxu0 0.0
      %1005 = vmatpush1.msra.mxu0 0.0
      %1006 = vmatprep.subr.mxu0 0.0
      %1007 = vmatpush1.msra.mxu0 0.0
      %1008 = vmatprep.subr.mxu0 0.0
      %1009 = vmatpush1.msra.mxu0 0.0
      %1010 = vmatprep.subr.mxu0 0.0
      %1011 = vmatpush1.msra.mxu0 0.0
      %1012 = vmatprep.subr.mxu0 0.0
      %1013 = vmatpush1.msra.mxu0 0.0
      %1014 = vmatprep.subr.mxu0 0.0
      %1015 = vmatpush1.msra.mxu0 0.0
      %1016 = vmatprep.subr.mxu0 0.0
      %1017 = vmatpush1.msra.mxu0 0.0
      %1018 = vmatprep.subr.mxu0 0.0
      %1019 = vmatpush1.msra.mxu0 0.0
      %1020 = vmatprep.subr.mxu0 0.0
      %1021 = vmatpush1.msra.mxu0 0.0
      %1022 = vmatprep.subr.mxu0 0.0
      %1023 = vmatpush1.msra.mxu0 0.0
      %1024 = vmatprep.subr.mxu0 0.0
      %1025 = vmatpush1.msra.mxu0 0.0
      %1026 = vmatprep.subr.mxu0 0.0
      %1027 = vmatpush1.msra.mxu0 0.0
      %1028 = vmatprep.subr.mxu0 0.0
      %1029 = vmatpush1.msra.mxu0 0.0
      %1030 = vmatprep.subr.mxu0 0.0
      %1031 = vmatpush1.msra.mxu0 0.0
      %1032 = vmatprep.subr.mxu0 0.0
      %1033 = vmatpush1.msra.mxu0 0.0
      %1034 = vmatprep.subr.mxu0 0.0
      %1035 = vmatpush1.msra.mxu0 0.0
      %1036 = vmatprep.subr.mxu0 0.0
      %1037 = vmatpush1.msra.mxu0 0.0
      %1038 = vmatprep.subr.mxu0 0.0
      %1039 = vmatpush1.msra.mxu0 0.0
      %1040 = vmatprep.mubr.f32.mxu0 0.0
      %1041 = vmatmul.mubr.f32.gmra.mrb[0].mxu0 %v974
      %v1042 = vpop.f32.mrb[0].mxu0
      %v1043 = vadd.f32 0.0, %v1042
      %v1044 = vpop.f32.mrb[0].mxu0
      %1045 = vdwg.mxu0
      %v1046 = vld [vmem:[#allocation4] sm:$0xff]
      %1048 = vset.pattern.permute.xlu0 3
      %1049 = vperm.xlu0 %1048, %v952
      %v1050 = vpop.permute.xlu0 %1049
      %v1052 = vmul.f32 %v1050, %v1046
      %1054 = vrot.lane.b32.xlu0 %v1043, 96
      %v1055 = vpop.permute.xlu0 %1054
      %v1057 = vadd.f32 %v1052, %v1055
      %vm1058 = vcmask 1048320
      %1059 = vst.msk [vmem:[#allocation4] sm:$0xff] %vm1058, %v1057
      // Predicated region
      $region37: #{multi_head_attention.4} parent=31 // pred_check
        %p1060 = pneg %p284
      $region38: #{multi_head_attention.4} parent=31 // pred_check_branch
        %1062 = sbr.rel (%p1060) target = $region40
      $region39: #{multi_head_attention.4} parent=31 // pred_region
        %v1063 = vld [vmem:[#allocation3] sm:$0xff]
        %v1064 = vrcp.pop %v1063
        %v1065 = vld [vmem:[#allocation4] sm:$0xff]
        %1067 = vset.pattern.permute.xlu0 0
        %1068 = vperm.xlu0 %1067, %v1064
        %v1069 = vpop.permute.xlu0 %1068
        %v1071 = vmul.f32 %v1065, %v1069
        %1072 = vst.msk [vmem:[#allocation4] sm:$0xff] %vm295, %v1071
        %v1073 = vld [vmem:[#allocation4] sm:$0xff]
        %1074 = vset.pattern.permute.xlu0 1
        %1075 = vperm.xlu0 %1074, %v1064
        %v1076 = vpop.permute.xlu0 %1075
        %v1078 = vmul.f32 %v1073, %v1076
        %1079 = vst.msk [vmem:[#allocation4] sm:$0xff] %vm672, %v1078
        %v1080 = vld [vmem:[#allocation4] sm:$0xff]
        %1081 = vset.pattern.permute.xlu0 2
        %1082 = vperm.xlu0 %1081, %v1064
        %v1083 = vpop.permute.xlu0 %1082
        %v1085 = vmul.f32 %v1080, %v1083
        %1086 = vst.msk [vmem:[#allocation4] sm:$0xff] %vm865, %v1085
        %v1087 = vld [vmem:[#allocation4] sm:$0xff]
        %1088 = vset.pattern.permute.xlu0 3
        %1089 = vperm.xlu0 %1088, %v1064
        %v1090 = vpop.permute.xlu0 %1089
        %v1092 = vmul.f32 %v1087, %v1090
        %1093 = vst.msk [vmem:[#allocation4] sm:$0xff] %vm1058, %v1092
        %v1094 = vld [vmem:[#allocation4] sm:$0xff]
        %1095 = vst [vmem:[%s283] sm:$0xff] %v1094
      $region40: #{multi_head_attention.4} parent=31 // pred_fallthru
        _
      %p1096 = scmp.lt.s32.totalorder %s19, 1
      %s1097 = scalar_select %p1096, %s19, 1
      %p1098 = scmp.lt.s32.totalorder %s20, 0
      %s1099 = scalar_select %p1098, %s20, 0
      %s1100 = sadd.s32 %s1099, %s1097
      %s1101 = smul.addr %s1100, 8
      %s1102 = scalar_lea.vmem %s3, %s1101
      // Predicated region
      $region41: #{multi_head_attention.4} parent=31 // pred_check
        %p1103 = pneg %p137
      $region42: #{multi_head_attention.4} parent=31 // pred_check_branch
        %1105 = sbr.rel (%p1103) target = $region44
      $region43: #{multi_head_attention.4} parent=31 // pred_region
        _
      $region44: #{multi_head_attention.4} parent=31 // pred_fallthru
        _
    $region32: #{multi_head_attention.4} parent=5 // pred_fallthru
      _
    %p1106 = scmp.le.s32.totalorder 2, %s9
    // Predicated region
    $region45: #{multi_head_attention.4} parent=5 // pred_check
      %p1107 = pneg %p1106
    $region46: #{multi_head_attention.4} parent=5 // pred_check_branch
      %1109 = sbr.rel (%p1107) target = $region48
    $region47: #{multi_head_attention.4} parent=5 // pred_region
      %s1110 = ssub.s32 %s9, 2
      // Predicated region
      $region49: #{multi_head_attention.4} parent=47 // pred_check
        %p1111 = pneg %p143
      $region50: #{multi_head_attention.4} parent=47 // pred_check_branch
        %1113 = sbr.rel (%p1111) target = $region52
      $region51: #{multi_head_attention.4} parent=47 // pred_region
        %p1114 = scmp.lt.s32.totalorder %s22, 1
        %s1115 = scalar_select %p1114, %s22, 1
        %p1116 = scmp.lt.s32.totalorder %s23, 0
        %s1117 = scalar_select %p1116, %s23, 0
        %s1118 = sadd.s32 %s1117, %s1115
        %s1119 = smul.addr %s1118, 8
        %s1120 = scalar_lea.vmem %s3, %s1119
      $region52: #{multi_head_attention.4} parent=47 // pred_fallthru
        _
    $region48: #{multi_head_attention.4} parent=5 // pred_fallthru
      _
  $region6: #{multi_head_attention.4} parent=0 // loop_footer
    %s13 = sadd.s32 1, %s9
  $region7: #{multi_head_attention.4} parent=0 // loop_footer_branch
    %8 = sbr.rel target = $region3
  $region8: #{multi_head_attention.4} parent=0 // loop_exit
    _

</llo_original>
